<compile_context>
chip_gen: v7x
topology: tpu7x:2x2x1
jax: 0.10.0
libtpu: 0.0.40
codegen_flags: <defaults>
</compile_context>

<pallas_src>
import jax
import jax.numpy as jnp
import numpy as np
from jax import lax
from jax.experimental import pallas as pl
from jax.experimental.pallas import tpu as pltpu

D = 768        # feature dim (fixed by the module)
NV = 10        # FM latent dim
NV_PAD = 128   # lane-padded latent dim; column NV holds the folded W row


def _round_up(x, m):
    return (x + m - 1) // m * m


def ntfm_kernel(c_ref, t_ref, T_ref, vc_ref, vt_ref, r_ref, w3_ref, b_ref, o_ref):
    # Inputs arrive in f32; cast to bf16 on the VPU for the MXU operands.
    c_f32 = c_ref[...]                      # [TB, D] f32
    t_f32 = t_ref[...]                      # [TB, D] f32
    c = c_f32.astype(jnp.bfloat16)
    t = t_f32.astype(jnp.bfloat16)

    w0 = w3_ref[0]
    w1 = w3_ref[1]
    w2 = w3_ref[2]
    b = b_ref[0]
    hw2 = 0.5 * w2

    # ---- 768-wide slab: w0 * (content @ T) * tag  -  0.5*w2 * (x^2 @ V^2) ----
    ct = jnp.dot(c, T_ref[...], preferred_element_type=jnp.float32)       # [TB, D]
    r_c = r_ref[0:1, :]                                                    # [1, D]
    r_t = r_ref[1:2, :]                                                    # [1, D]
    slab_d = (w0 * (ct * t_f32)
              - hw2 * ((c_f32 * c_f32) * r_c + (t_f32 * t_f32) * r_t))     # [TB, D] f32
    s_d = jnp.sum(slab_d, axis=1)                                          # [TB]

    # ---- 128-wide slab: FM first term (cols < NV) + folded linear term ----
    xv = (jnp.dot(c, vc_ref[...], preferred_element_type=jnp.float32)
          + jnp.dot(t, vt_ref[...], preferred_element_type=jnp.float32))   # [TB, NV_PAD]
    col = lax.broadcasted_iota(jnp.int32, xv.shape, 1)
    slab_v = (jnp.where(col < NV, hw2 * (xv * xv), 0.0)
              + jnp.where(col == NV, w1 * xv, 0.0))
    s_v = jnp.sum(slab_v, axis=1)                                          # [TB]

    # y = w0*x1 + w1*x2 + w2*pair + b ; output = relu(y), stored lane-dense.
    y = s_d + s_v + b
    o_ref[0, :] = jnp.maximum(y, 0.0)


def neural_tensor_fm(content, tag, T, W, V, weights, b, *, batch_tile=512):
    B = content.shape[0]

    # Tile selection: multiples of 16 (bf16 sublane packing), never bigger
    # than the padded batch; split a single big tile so the grid has >= 2
    # parallel steps (keeps both v7x TensorCores busy).
    batch_tile = _round_up(max(batch_tile, 16), 16)
    tile = min(batch_tile, _round_up(B, 16))
    if B <= tile and B >= 256:
        tile = _round_up(-(-B // 2), 16)
    B_pad = _round_up(B, tile)
    if B_pad != B:
        pad = B_pad - B
        content = jnp.pad(content, ((0, pad), (0, 0)))
        tag = jnp.pad(tag, ((0, pad), (0, 0)))
    grid_n = B_pad // tile

    # --- parameter glue (plain JAX, tiny, done once outside the hot loop) ---
    f32 = jnp.float32
    Vc = V[:D].astype(f32)
    Vt = V[D:].astype(f32)
    wc = W[:D, 0].astype(f32)
    wt = W[D:, 0].astype(f32)
    vc_pad = jnp.zeros((D, NV_PAD), f32).at[:, :NV].set(Vc).at[:, NV].set(wc)
    vt_pad = jnp.zeros((D, NV_PAD), f32).at[:, :NV].set(Vt).at[:, NV].set(wt)
    rct = (jnp.zeros((8, D), f32)
           .at[0, :].set(jnp.sum(Vc * Vc, axis=1))
           .at[1, :].set(jnp.sum(Vt * Vt, axis=1)))

    # bf16 MXU operands (one-time casts of the small params only).
    T_bf = T.astype(jnp.bfloat16)
    vc_bf = vc_pad.astype(jnp.bfloat16)
    vt_bf = vt_pad.astype(jnp.bfloat16)

    content = content.astype(f32)
    tag = tag.astype(f32)
    weights = weights.astype(f32)
    b = b.astype(f32)

    flops = 2 * B_pad * D * D + 4 * B_pad * D * NV_PAD + 8 * B_pad * D
    bytes_accessed = (2 * B_pad * D * 4          # content + tag (f32)
                      + D * D * 2                # T (bf16)
                      + 2 * D * NV_PAD * 2       # padded V halves (bf16)
                      + 8 * D * 4                # r vectors
                      + B_pad * 4)               # output

    out = pl.pallas_call(
        ntfm_kernel,
        out_shape=jax.ShapeDtypeStruct((grid_n, tile), jnp.float32),
        grid=(grid_n,),
        in_specs=[
            pl.BlockSpec((tile, D), lambda i: (i, 0)),          # content tile (f32)
            pl.BlockSpec((tile, D), lambda i: (i, 0)),          # tag tile (f32)
            pl.BlockSpec((D, D), lambda i: (0, 0)),             # T (bf16)
            pl.BlockSpec((D, NV_PAD), lambda i: (0, 0)),        # V content half + W col
            pl.BlockSpec((D, NV_PAD), lambda i: (0, 0)),        # V tag half + W col
            pl.BlockSpec((8, D), lambda i: (0, 0)),             # r_c / r_t rows (f32)
            pl.BlockSpec(memory_space=pltpu.MemorySpace.SMEM),  # weights (3,)
            pl.BlockSpec(memory_space=pltpu.MemorySpace.SMEM),  # b (1,)
        ],
        out_specs=pl.BlockSpec((1, tile), lambda i: (i, 0)),    # lane-dense row
        compiler_params=pltpu.CompilerParams(
            dimension_semantics=("parallel",),
            vmem_limit_bytes=48 * 1024 * 1024,
        ),
        cost_estimate=pl.CostEstimate(flops=flops, transcendentals=0,
                                      bytes_accessed=bytes_accessed),
    )(content, tag, T_bf, vc_bf, vt_bf, rct, weights, b)

    # .squeeze() in the PyTorch module -> [B]
    return out.reshape(-1)[:B]


def ref_forward(content, tag, T, W, V, weights, b):
    x1 = jnp.sum((content @ T) * tag, axis=1, keepdims=True)
    x = jnp.concatenate([content, tag], axis=1)
    x2 = x @ W
    pair = 0.5 * jnp.sum((x @ V) ** 2 - (x ** 2) @ (V ** 2),
                         axis=1, keepdims=True)
    y = jnp.concatenate([x1, x2, pair], axis=1) @ weights
    return jnp.maximum(y + b, 0.0)


if __name__ == "__main__":
    B = 8
    key = jax.random.PRNGKey(0)
    kT, kW, kV, kc, kt = jax.random.split(key, 5)

    # xavier_normal_ init: std = sqrt(2 / (fan_in + fan_out))
    T = jax.random.normal(kT, (D, D), jnp.float32) * jnp.sqrt(2.0 / (D + D))
    W = jax.random.normal(kW, (2 * D, 1), jnp.float32) * jnp.sqrt(2.0 / (2 * D + 1))
    V = jax.random.normal(kV, (2 * D, NV), jnp.float32) * jnp.sqrt(2.0 / (2 * D + NV))
    weights = jnp.ones((3,), jnp.float32)
    b = jnp.zeros((1,), jnp.float32)

    content = jax.random.normal(kc, (B, D), jnp.float32)
    tag = jax.random.normal(kt, (B, D), jnp.float32)

    out = neural_tensor_fm(content, tag, T, W, V, weights, b)
    out = jax.block_until_ready(out)

    ref = ref_forward(content, tag, T, W, V, weights, b)
    # bf16 MXU operands over K=768 => a few-percent relative error budget
    # (the cancellation-prone pair subtraction is now done in f32 on the VPU).
    np.testing.assert_allclose(np.asarray(out), np.asarray(ref),
                               rtol=3e-2, atol=2.5e-1)
    print("KERNEL_OK")
</pallas_src>

<mosaic_0001>
module attributes {stable_mosaic.version = 11 : i64} {
  func.func @ntfm_kernel(%arg0: i32, %arg1: memref<16x768xf32, #tpu.memory_space<vmem>>, %arg2: memref<16x768xf32, #tpu.memory_space<vmem>>, %arg3: memref<768x768xbf16, #tpu.memory_space<vmem>>, %arg4: memref<768x128xbf16, #tpu.memory_space<vmem>>, %arg5: memref<768x128xbf16, #tpu.memory_space<vmem>>, %arg6: memref<8x768xf32, #tpu.memory_space<vmem>>, %arg7: memref<3xf32, #tpu.memory_space<smem>>, %arg8: memref<1xf32, #tpu.memory_space<smem>>, %arg9: memref<1x16xf32, #tpu.memory_space<vmem>>) attributes {dimension_semantics = [#tpu.dimension_semantics<parallel>], iteration_bounds = array<i64: 1>, scalar_prefetch = 0 : i64, scratch_operands = 0 : i64, tpu.core_type = #tpu.core_type<tc>, window_params = [{transform_indices = @transform_0, window_bounds = array<i64: 16, 768>}, {transform_indices = @transform_1, window_bounds = array<i64: 16, 768>}, {pipeline_mode = #tpu.pipeline_mode<synchronous>, transform_indices = @transform_2, window_bounds = array<i64: 768, 768>}, {pipeline_mode = #tpu.pipeline_mode<synchronous>, transform_indices = @transform_3, window_bounds = array<i64: 768, 128>}, {pipeline_mode = #tpu.pipeline_mode<synchronous>, transform_indices = @transform_4, window_bounds = array<i64: 768, 128>}, {pipeline_mode = #tpu.pipeline_mode<synchronous>, transform_indices = @transform_5, window_bounds = array<i64: 8, 768>}, {transform_indices = @transform_6, window_bounds = array<i64: 3>}, {transform_indices = @transform_7, window_bounds = array<i64: 1>}, {transform_indices = @transform_8, window_bounds = array<i64: 1, 16>}]} {
    %c0 = arith.constant 0 : index
    %c0_0 = arith.constant 0 : index
    %0 = vector.load %arg1[%c0, %c0_0] : memref<16x768xf32, #tpu.memory_space<vmem>>, vector<16x768xf32>
    %c0_1 = arith.constant 0 : index
    %c0_2 = arith.constant 0 : index
    %1 = vector.load %arg2[%c0_1, %c0_2] : memref<16x768xf32, #tpu.memory_space<vmem>>, vector<16x768xf32>
    %2 = arith.truncf %0 : vector<16x768xf32> to vector<16x768xbf16>
    %3 = arith.truncf %1 : vector<16x768xf32> to vector<16x768xbf16>
    %c0_3 = arith.constant 0 : index
    %4 = memref.load %arg7[%c0_3] : memref<3xf32, #tpu.memory_space<smem>>
    %c1 = arith.constant 1 : index
    %5 = memref.load %arg7[%c1] : memref<3xf32, #tpu.memory_space<smem>>
    %c2 = arith.constant 2 : index
    %6 = memref.load %arg7[%c2] : memref<3xf32, #tpu.memory_space<smem>>
    %c0_4 = arith.constant 0 : index
    %7 = memref.load %arg8[%c0_4] : memref<1xf32, #tpu.memory_space<smem>>
    %cst = arith.constant 5.000000e-01 : f32
    %8 = arith.mulf %cst, %6 : f32
    %c0_5 = arith.constant 0 : index
    %c0_6 = arith.constant 0 : index
    %9 = vector.load %arg3[%c0_5, %c0_6] : memref<768x768xbf16, #tpu.memory_space<vmem>>, vector<768x768xbf16>
    %cst_7 = arith.constant dense<0.000000e+00> : vector<16x768xf32>
    %10 = tpu.matmul %2, %9, %cst_7 {dimension_numbers = #tpu.dot_dimension_numbers<[1], [0], [0], [1], [0, 0, 1, 1], [], []>} : vector<16x768xbf16>, vector<768x768xbf16>, vector<16x768xf32> -> vector<16x768xf32>
    %c0_8 = arith.constant 0 : index
    %c0_9 = arith.constant 0 : index
    %11 = vector.load %arg6[%c0_8, %c0_9] : memref<8x768xf32, #tpu.memory_space<vmem>>, vector<1x768xf32>
    %c1_10 = arith.constant 1 : index
    %c0_11 = arith.constant 0 : index
    %12 = vector.load %arg6[%c1_10, %c0_11] : memref<8x768xf32, #tpu.memory_space<vmem>>, vector<1x768xf32>
    %13 = arith.mulf %10, %1 : vector<16x768xf32>
    %14 = vector.broadcast %4 : f32 to vector<16x768xf32>
    %15 = arith.mulf %14, %13 : vector<16x768xf32>
    %16 = arith.mulf %0, %0 : vector<16x768xf32>
    %17 = vector.broadcast %11 : vector<1x768xf32> to vector<16x768xf32>
    %18 = arith.mulf %16, %17 : vector<16x768xf32>
    %19 = arith.mulf %1, %1 : vector<16x768xf32>
    %20 = vector.broadcast %12 : vector<1x768xf32> to vector<16x768xf32>
    %21 = arith.mulf %19, %20 : vector<16x768xf32>
    %22 = arith.addf %18, %21 : vector<16x768xf32>
    %23 = vector.broadcast %8 : f32 to vector<16x768xf32>
    %24 = arith.mulf %23, %22 : vector<16x768xf32>
    %25 = arith.subf %15, %24 : vector<16x768xf32>
    %cst_12 = arith.constant dense<0.000000e+00> : vector<16xf32>
    %26 = vector.multi_reduction <add>, %25, %cst_12 [1] : vector<16x768xf32> to vector<16xf32>
    %c0_13 = arith.constant 0 : index
    %c0_14 = arith.constant 0 : index
    %27 = vector.load %arg4[%c0_13, %c0_14] : memref<768x128xbf16, #tpu.memory_space<vmem>>, vector<768x128xbf16>
    %cst_15 = arith.constant dense<0.000000e+00> : vector<16x128xf32>
    %28 = tpu.matmul %2, %27, %cst_15 {dimension_numbers = #tpu.dot_dimension_numbers<[1], [0], [0], [1], [0, 0, 1, 1], [], []>} : vector<16x768xbf16>, vector<768x128xbf16>, vector<16x128xf32> -> vector<16x128xf32>
    %c0_16 = arith.constant 0 : index
    %c0_17 = arith.constant 0 : index
    %29 = vector.load %arg5[%c0_16, %c0_17] : memref<768x128xbf16, #tpu.memory_space<vmem>>, vector<768x128xbf16>
    %cst_18 = arith.constant dense<0.000000e+00> : vector<16x128xf32>
    %30 = tpu.matmul %3, %29, %cst_18 {dimension_numbers = #tpu.dot_dimension_numbers<[1], [0], [0], [1], [0, 0, 1, 1], [], []>} : vector<16x768xbf16>, vector<768x128xbf16>, vector<16x128xf32> -> vector<16x128xf32>
    %31 = arith.addf %28, %30 : vector<16x128xf32>
    %32 = tpu.iota {dimensions = array<i32: 1>} : vector<16x128xi32>
    %c10_i32 = arith.constant 10 : i32
    %33 = vector.broadcast %c10_i32 : i32 to vector<16x128xi32>
    %34 = arith.cmpi slt, %32, %33 : vector<16x128xi32>
    %35 = arith.mulf %31, %31 : vector<16x128xf32>
    %36 = vector.broadcast %8 : f32 to vector<16x128xf32>
    %37 = arith.mulf %36, %35 : vector<16x128xf32>
    %cst_19 = arith.constant 0.000000e+00 : f32
    %38 = vector.broadcast %cst_19 : f32 to vector<16x128xf32>
    %39 = arith.select %34, %37, %38 : vector<16x128xi1>, vector<16x128xf32>
    %c10_i32_20 = arith.constant 10 : i32
    %40 = vector.broadcast %c10_i32_20 : i32 to vector<16x128xi32>
    %41 = arith.cmpi eq, %32, %40 : vector<16x128xi32>
    %42 = vector.broadcast %5 : f32 to vector<16x128xf32>
    %43 = arith.mulf %42, %31 : vector<16x128xf32>
    %cst_21 = arith.constant 0.000000e+00 : f32
    %44 = vector.broadcast %cst_21 : f32 to vector<16x128xf32>
    %45 = arith.select %41, %43, %44 : vector<16x128xi1>, vector<16x128xf32>
    %46 = arith.addf %39, %45 : vector<16x128xf32>
    %cst_22 = arith.constant dense<0.000000e+00> : vector<16xf32>
    %47 = vector.multi_reduction <add>, %46, %cst_22 [1] : vector<16x128xf32> to vector<16xf32>
    %48 = arith.addf %26, %47 : vector<16xf32>
    %49 = vector.broadcast %7 : f32 to vector<16xf32>
    %50 = arith.addf %48, %49 : vector<16xf32>
    %cst_23 = arith.constant 0.000000e+00 : f32
    %51 = vector.broadcast %cst_23 : f32 to vector<16xf32>
    %52 = arith.maximumf %50, %51 : vector<16xf32>
    %c0_24 = arith.constant 0 : index
    %c0_25 = arith.constant 0 : index
    %53 = vector.load %arg9[%c0_24, %c0_25] : memref<1x16xf32, #tpu.memory_space<vmem>>, vector<1x16xf32>
    %54 = vector.shape_cast %53 : vector<1x16xf32> to vector<16xf32>
    %55 = vector.shape_cast %52 : vector<16xf32> to vector<1x16xf32>
    tpu.vector_store %arg9[%c0_24, %c0_25], %55 {strides = array<i32>} : memref<1x16xf32, #tpu.memory_space<vmem>>, vector<1x16xf32>,
    return
  }
  func.func @transform_0(%arg0: i32) -> (i32, i32) {
    %c0_i32 = arith.constant 0 : i32
    %c0_i32_0 = arith.constant 0 : i32
    return %arg0, %c0_i32 : i32, i32
  }
  func.func @transform_1(%arg0: i32) -> (i32, i32) {
    %c0_i32 = arith.constant 0 : i32
    %c0_i32_0 = arith.constant 0 : i32
    return %arg0, %c0_i32 : i32, i32
  }
  func.func @transform_2(%arg0: i32) -> (i32, i32) {
    %c0_i32 = arith.constant 0 : i32
    %c0_i32_0 = arith.constant 0 : i32
    %c0_i32_1 = arith.constant 0 : i32
    return %c0_i32, %c0_i32_0 : i32, i32
  }
  func.func @transform_3(%arg0: i32) -> (i32, i32) {
    %c0_i32 = arith.constant 0 : i32
    %c0_i32_0 = arith.constant 0 : i32
    %c0_i32_1 = arith.constant 0 : i32
    return %c0_i32, %c0_i32_0 : i32, i32
  }
  func.func @transform_4(%arg0: i32) -> (i32, i32) {
    %c0_i32 = arith.constant 0 : i32
    %c0_i32_0 = arith.constant 0 : i32
    %c0_i32_1 = arith.constant 0 : i32
    return %c0_i32, %c0_i32_0 : i32, i32
  }
  func.func @transform_5(%arg0: i32) -> (i32, i32) {
    %c0_i32 = arith.constant 0 : i32
    %c0_i32_0 = arith.constant 0 : i32
    %c0_i32_1 = arith.constant 0 : i32
    return %c0_i32, %c0_i32_0 : i32, i32
  }
  func.func @transform_6(%arg0: i32) -> i32 {
    %c0_i32 = arith.constant 0 : i32
    %c0_i32_0 = arith.constant 0 : i32
    return %c0_i32 : i32
  }
  func.func @transform_7(%arg0: i32) -> i32 {
    %c0_i32 = arith.constant 0 : i32
    %c0_i32_0 = arith.constant 0 : i32
    return %c0_i32 : i32
  }
  func.func @transform_8(%arg0: i32) -> (i32, i32) {
    %c0_i32 = arith.constant 0 : i32
    %c0_i32_0 = arith.constant 0 : i32
    return %arg0, %c0_i32 : i32, i32
  }
}

</mosaic_0001>

<llo_original>
// kernel: tpu_custom_call.1
$region0: #{tpu_custom_call.1}
  #allocation0 [shape = 'u32[]', space=smem, size = 0x4, offset = 0x4, fixed_abs, tag = 'smem constant byte address 0x4 - core index']
  #allocation1 [shape = 'u32[144,128]{1,0:T(1,128)}', space=vmem, size = 0x12000, scoped, tag = 'internal scratch']
  #allocation2 [shape = 'f32[1]{0:T(128)S(6)}', space=smem, size = 0x200, scoped, tag = 'scoped memory for tpu_custom_call.1']
  %s0 = inlined_call_operand.hbm [shape: f32[16,768], index: 0, kind: input, shape index: {}]
  %s1 = inlined_call_operand.hbm [shape: f32[16,768], index: 1, kind: input, shape index: {}]
  %s2 = inlined_call_operand.hbm [shape: bf16[768,768], index: 2, kind: input, shape index: {}]
  %s3 = inlined_call_operand.hbm [shape: bf16[768,128], index: 3, kind: input, shape index: {}]
  %s4 = inlined_call_operand.hbm [shape: bf16[768,128], index: 4, kind: input, shape index: {}]
  %s5 = inlined_call_operand.hbm [shape: f32[8,768], index: 5, kind: input, shape index: {}]
  %s6 = inlined_call_operand.hbm [shape: f32[3], index: 6, kind: input, shape index: {}]
  %s7 = inlined_call_operand.<no memory space> [shape: f32[1], index: 7, kind: input, shape index: {}]
  %s8 = inlined_call_operand.hbm [shape: f32[1,16], index: 8, kind: output, shape index: {}]
  %s9 = sld [smem:[#allocation0]]
  $region70: #{tpu_custom_call.1} parent=0
    _
  %s11 = ssub.s32 1, %s9
  %s12 = scalar_select 0, %s11, %s9
  %13 = sst [smem:[#allocation2]] %s7
  $region1: #{tpu_custom_call.1} parent=0
    #allocation3 [shape = 'u8[49152]{0}', space=vmem, size = 0xc000, scoped, tag = 'input window, operand 0, single buffered']
    #allocation4 [shape = 's32[1]{0}', space=sflag, size = 0x4, scoped, tag = 'scoped memory for tpu_custom_call.1']
    #allocation5 [shape = 's32[1]{0}', space=sflag, size = 0x4, scoped, tag = 'scoped memory for tpu_custom_call.1']
    #allocation6 [shape = 's32[1]{0}', space=sflag, size = 0x4, scoped, tag = 'scoped memory for tpu_custom_call.1']
    #allocation7 [shape = 'u8[49152]{0}', space=vmem, size = 0xc000, scoped, tag = 'input window, operand 1, single buffered']
    #allocation8 [shape = 's32[1]{0}', space=sflag, size = 0x4, scoped, tag = 'scoped memory for tpu_custom_call.1']
    #allocation9 [shape = 'u8[1179648]{0}', space=vmem, size = 0x120000, scoped, tag = 'input window, operand 2, single buffered']
    #allocation10 [shape = 'u8[196608]{0}', space=vmem, size = 0x30000, scoped, tag = 'input window, operand 3, single buffered']
    #allocation11 [shape = 's32[1]{0}', space=sflag, size = 0x4, scoped, tag = 'scoped memory for tpu_custom_call.1']
    #allocation12 [shape = 'u8[196608]{0}', space=vmem, size = 0x30000, scoped, tag = 'input window, operand 4, single buffered']
    #allocation13 [shape = 'u8[24576]{0}', space=vmem, size = 0x6000, scoped, tag = 'input window, operand 5, single buffered']
    #allocation14 [shape = 's32[1]{0}', space=sflag, size = 0x4, scoped, tag = 'scoped memory for tpu_custom_call.1']
    #allocation15 [shape = 'u8[512]{0}', space=smem, size = 0x200, scoped, tag = 'input window, operand 6, single buffered']
    #allocation16 [shape = 'u8[512]{0}', space=vmem, size = 0x400, scoped, tag = 'output window, operand 0, single buffered']
    %14 = vsyncpa [#allocation4], 0
    %15 = vsyncpa [#allocation8], 0
    %16 = vsyncpa [#allocation11], 0
    %17 = vsyncpa [#allocation14], 0
    %18 = vsyncpa [#allocation6], 0
    %19 = vsyncpa [#allocation5], 0
    // Predicated region
    $region2: #{tpu_custom_call.1} parent=1 // pred_check
      _
    $region3: #{tpu_custom_call.1} parent=1 // pred_check_branch
      %21 = sbr.rel (0) target = $region5
    $region4: #{tpu_custom_call.1} parent=1 // pred_region
      %s23 = ssub.s32 1536, 1536
      %24 = vsyncadd [#allocation4], %s23
      %s25 = sshll.u32 [#allocation3], 4
      %s26 = int_to_ptr.vmem [resolvable:$true] %s25
      %31 = dma.hbm_to_vmem [thread:$0]  %s0, 1536, %s26, [#allocation4], 768, 768, 48
    $region5: #{tpu_custom_call.1} parent=1 // pred_fallthru
      _
    // Predicated region
    $region6: #{tpu_custom_call.1} parent=1 // pred_check
      _
    $region7: #{tpu_custom_call.1} parent=1 // pred_check_branch
      %33 = sbr.rel (0) target = $region9
    $region8: #{tpu_custom_call.1} parent=1 // pred_region
      %s35 = ssub.s32 1536, 1536
      %36 = vsyncadd [#allocation8], %s35
      %s37 = sshll.u32 [#allocation7], 4
      %s38 = int_to_ptr.vmem [resolvable:$true] %s37
      %43 = dma.hbm_to_vmem [thread:$0]  %s1, 1536, %s38, [#allocation8], 768, 768, 48
    $region9: #{tpu_custom_call.1} parent=1 // pred_fallthru
      _
    // Predicated region
    $region10: #{tpu_custom_call.1} parent=1 // pred_check
      _
    $region11: #{tpu_custom_call.1} parent=1 // pred_check_branch
      %45 = sbr.rel (0) target = $region13
    $region12: #{tpu_custom_call.1} parent=1 // pred_region
      %s47 = ssub.s32 36864, 36864
      %48 = vsyncadd [#allocation8], %s47
      %s49 = sshll.u32 [#allocation9], 4
      %s50 = int_to_ptr.vmem [resolvable:$true] %s49
      %55 = dma.hbm_to_vmem [thread:$0]  %s2, 36864, %s50, [#allocation8], 384, 384, 24
    $region13: #{tpu_custom_call.1} parent=1 // pred_fallthru
      _
    // Predicated region
    $region14: #{tpu_custom_call.1} parent=1 // pred_check
      _
    $region15: #{tpu_custom_call.1} parent=1 // pred_check_branch
      %57 = sbr.rel (0) target = $region17
    $region16: #{tpu_custom_call.1} parent=1 // pred_region
      %s59 = ssub.s32 6144, 6144
      %60 = vsyncadd [#allocation11], %s59
      %s61 = sshll.u32 [#allocation10], 4
      %s62 = int_to_ptr.vmem [resolvable:$true] %s61
      %67 = dma.hbm_to_vmem [thread:$0]  %s3, 6144, %s62, [#allocation11], 64, 64, 4
    $region17: #{tpu_custom_call.1} parent=1 // pred_fallthru
      _
    // Predicated region
    $region18: #{tpu_custom_call.1} parent=1 // pred_check
      _
    $region19: #{tpu_custom_call.1} parent=1 // pred_check_branch
      %69 = sbr.rel (0) target = $region21
    $region20: #{tpu_custom_call.1} parent=1 // pred_region
      %s71 = ssub.s32 6144, 6144
      %72 = vsyncadd [#allocation11], %s71
      %s73 = sshll.u32 [#allocation12], 4
      %s74 = int_to_ptr.vmem [resolvable:$true] %s73
      %79 = dma.hbm_to_vmem [thread:$0]  %s4, 6144, %s74, [#allocation11], 64, 64, 4
    $region21: #{tpu_custom_call.1} parent=1 // pred_fallthru
      _
    // Predicated region
    $region22: #{tpu_custom_call.1} parent=1 // pred_check
      _
    $region23: #{tpu_custom_call.1} parent=1 // pred_check_branch
      %81 = sbr.rel (0) target = $region25
    $region24: #{tpu_custom_call.1} parent=1 // pred_region
      %s83 = ssub.s32 768, 768
      %84 = vsyncadd [#allocation14], %s83
      %s86 = sshll.u32 [#allocation13], 4
      %s87 = int_to_ptr.vmem [resolvable:$true] %s86
      %89 = dma.hbm_to_vmem [thread:$0]  %s5, 768, %s87, [#allocation14]
    $region25: #{tpu_custom_call.1} parent=1 // pred_fallthru
      _
    // Predicated region
    $region26: #{tpu_custom_call.1} parent=1 // pred_check
      _
    $region27: #{tpu_custom_call.1} parent=1 // pred_check_branch
      %91 = sbr.rel (0) target = $region29
    $region28: #{tpu_custom_call.1} parent=1 // pred_region
      %s93 = ssub.s32 16, 16
      %94 = vsyncadd [#allocation6], %s93
      %97 = dma.hbm_to_smem %s6, 16, [#allocation15], [#allocation6]
    $region29: #{tpu_custom_call.1} parent=1 // pred_fallthru
      _
    // Predicated region
    $region30: #{tpu_custom_call.1} parent=1 // pred_check
      _
    $region31: #{tpu_custom_call.1} parent=1 // pred_check_branch
      %99 = sbr.rel (0) target = $region33
    $region32: #{tpu_custom_call.1} parent=1 // pred_region
      _
    $region33: #{tpu_custom_call.1} parent=1 // pred_fallthru
      _
    // Predicated region
    $region34: #{tpu_custom_call.1} parent=1 // pred_check
      _
    $region35: #{tpu_custom_call.1} parent=1 // pred_check_branch
      %101 = sbr.rel (0) target = $region37
    $region36: #{tpu_custom_call.1} parent=1 // pred_region
      %102 = dma.done [#allocation4], 1536
    $region37: #{tpu_custom_call.1} parent=1 // pred_fallthru
      _
    // Predicated region
    $region38: #{tpu_custom_call.1} parent=1 // pred_check
      _
    $region39: #{tpu_custom_call.1} parent=1 // pred_check_branch
      %104 = sbr.rel (0) target = $region41
    $region40: #{tpu_custom_call.1} parent=1 // pred_region
      %105 = dma.done [#allocation8], 1536
    $region41: #{tpu_custom_call.1} parent=1 // pred_fallthru
      _
    // Predicated region
    $region42: #{tpu_custom_call.1} parent=1 // pred_check
      _
    $region43: #{tpu_custom_call.1} parent=1 // pred_check_branch
      %107 = sbr.rel (0) target = $region45
    $region44: #{tpu_custom_call.1} parent=1 // pred_region
      %108 = dma.done [#allocation8], 36864
    $region45: #{tpu_custom_call.1} parent=1 // pred_fallthru
      _
    // Predicated region
    $region46: #{tpu_custom_call.1} parent=1 // pred_check
      _
    $region47: #{tpu_custom_call.1} parent=1 // pred_check_branch
      %110 = sbr.rel (0) target = $region49
    $region48: #{tpu_custom_call.1} parent=1 // pred_region
      %111 = dma.done [#allocation11], 6144
    $region49: #{tpu_custom_call.1} parent=1 // pred_fallthru
      _
    // Predicated region
    $region50: #{tpu_custom_call.1} parent=1 // pred_check
      _
    $region51: #{tpu_custom_call.1} parent=1 // pred_check_branch
      %113 = sbr.rel (0) target = $region53
    $region52: #{tpu_custom_call.1} parent=1 // pred_region
      %114 = dma.done [#allocation11], 6144
    $region53: #{tpu_custom_call.1} parent=1 // pred_fallthru
      _
    // Predicated region
    $region54: #{tpu_custom_call.1} parent=1 // pred_check
      _
    $region55: #{tpu_custom_call.1} parent=1 // pred_check_branch
      %116 = sbr.rel (0) target = $region57
    $region56: #{tpu_custom_call.1} parent=1 // pred_region
      %117 = dma.done [#allocation14], 768
    $region57: #{tpu_custom_call.1} parent=1 // pred_fallthru
      _
    // Predicated region
    $region58: #{tpu_custom_call.1} parent=1 // pred_check
      _
    $region59: #{tpu_custom_call.1} parent=1 // pred_check_branch
      %119 = sbr.rel (0) target = $region61
    $region60: #{tpu_custom_call.1} parent=1 // pred_region
      %120 = dma.done [#allocation6], 16
    $region61: #{tpu_custom_call.1} parent=1 // pred_fallthru
      _
    %121 = sfence
    %v123 = vld [vmem:[#allocation3] sm:$0xff]
    %v124 = vld [vmem:[#allocation3 + $0x8] sm:$0xff]
    %v125 = vld [vmem:[#allocation3 + $0x10] sm:$0xff]
    %v126 = vld [vmem:[#allocation3 + $0x18] sm:$0xff]
    %v127 = vld [vmem:[#allocation3 + $0x20] sm:$0xff]
    %v128 = vld [vmem:[#allocation3 + $0x28] sm:$0xff]
    %v129 = vld [vmem:[#allocation3 + $0x30] sm:$0xff]
    %v130 = vld [vmem:[#allocation3 + $0x38] sm:$0xff]
    %v131 = vld [vmem:[#allocation3 + $0x40] sm:$0xff]
    %v132 = vld [vmem:[#allocation3 + $0x48] sm:$0xff]
    %v133 = vld [vmem:[#allocation3 + $0x50] sm:$0xff]
    %v134 = vld [vmem:[#allocation3 + $0x58] sm:$0xff]
    %v135 = vld [vmem:[#allocation7] sm:$0xff]
    %v136 = vld [vmem:[#allocation7 + $0x8] sm:$0xff]
    %v137 = vld [vmem:[#allocation7 + $0x10] sm:$0xff]
    %v138 = vld [vmem:[#allocation7 + $0x18] sm:$0xff]
    %v139 = vld [vmem:[#allocation7 + $0x20] sm:$0xff]
    %v140 = vld [vmem:[#allocation7 + $0x28] sm:$0xff]
    %v141 = vld [vmem:[#allocation7 + $0x30] sm:$0xff]
    %v142 = vld [vmem:[#allocation7 + $0x38] sm:$0xff]
    %v143 = vld [vmem:[#allocation7 + $0x40] sm:$0xff]
    %v144 = vld [vmem:[#allocation7 + $0x48] sm:$0xff]
    %v145 = vld [vmem:[#allocation7 + $0x50] sm:$0xff]
    %v146 = vld [vmem:[#allocation7 + $0x58] sm:$0xff]
    %v147 = vpack.c.bf16 %v129, %v123
    %v148 = vpack.c.bf16 %v130, %v124
    %v149 = vpack.c.bf16 %v131, %v125
    %v150 = vpack.c.bf16 %v132, %v126
    %v151 = vpack.c.bf16 %v133, %v127
    %v152 = vpack.c.bf16 %v134, %v128
    %v153 = vpack.c.bf16 %v141, %v135
    %v154 = vpack.c.bf16 %v142, %v136
    %v155 = vpack.c.bf16 %v143, %v137
    %v156 = vpack.c.bf16 %v144, %v138
    %v157 = vpack.c.bf16 %v145, %v139
    %v158 = vpack.c.bf16 %v146, %v140
    %s159 = sld [smem:[#allocation15]]
    %s160 = sld [smem:[#allocation15 + $0x1]]
    %s161 = sld [smem:[#allocation15 + $0x2]]
    %s162 = sld [smem:[#allocation2]]
    %s163 = smul.f32 %s161, 0.5
    %v164 = vld [vmem:[#allocation9] sm:$0xff]
    %v165 = vld [vmem:[#allocation9 + $0x8] sm:$0xff]
    %v166 = vld [vmem:[#allocation9 + $0x10] sm:$0xff]
    %v167 = vld [vmem:[#allocation9 + $0x18] sm:$0xff]
    %v168 = vld [vmem:[#allocation9 + $0x20] sm:$0xff]
    %v169 = vld [vmem:[#allocation9 + $0x28] sm:$0xff]
    %v170 = vld [vmem:[#allocation9 + $0x30] sm:$0xff]
    %v171 = vld [vmem:[#allocation9 + $0x38] sm:$0xff]
    %v172 = vld [vmem:[#allocation9 + $0x40] sm:$0xff]
    %v173 = vld [vmem:[#allocation9 + $0x48] sm:$0xff]
    %v174 = vld [vmem:[#allocation9 + $0x50] sm:$0xff]
    %v175 = vld [vmem:[#allocation9 + $0x58] sm:$0xff]
    %v176 = vld [vmem:[#allocation9 + $0x60] sm:$0xff]
    %v177 = vld [vmem:[#allocation9 + $0x68] sm:$0xff]
    %v178 = vld [vmem:[#allocation9 + $0x70] sm:$0xff]
    %v179 = vld [vmem:[#allocation9 + $0x78] sm:$0xff]
    %v180 = vld [vmem:[#allocation9 + $0x80] sm:$0xff]
    %v181 = vld [vmem:[#allocation9 + $0x88] sm:$0xff]
    %v182 = vld [vmem:[#allocation9 + $0x90] sm:$0xff]
    %v183 = vld [vmem:[#allocation9 + $0x98] sm:$0xff]
    %v184 = vld [vmem:[#allocation9 + $0xa0] sm:$0xff]
    %v185 = vld [vmem:[#allocation9 + $0xa8] sm:$0xff]
    %v186 = vld [vmem:[#allocation9 + $0xb0] sm:$0xff]
    %v187 = vld [vmem:[#allocation9 + $0xb8] sm:$0xff]
    %v188 = vld [vmem:[#allocation9 + $0xc0] sm:$0xff]
    %v189 = vld [vmem:[#allocation9 + $0xc8] sm:$0xff]
    %v190 = vld [vmem:[#allocation9 + $0xd0] sm:$0xff]
    %v191 = vld [vmem:[#allocation9 + $0xd8] sm:$0xff]
    %v192 = vld [vmem:[#allocation9 + $0xe0] sm:$0xff]
    %v193 = vld [vmem:[#allocation9 + $0xe8] sm:$0xff]
    %v194 = vld [vmem:[#allocation9 + $0xf0] sm:$0xff]
    %v195 = vld [vmem:[#allocation9 + $0xf8] sm:$0xff]
    %v196 = vld [vmem:[#allocation9 + $0x100] sm:$0xff]
    %v197 = vld [vmem:[#allocation9 + $0x108] sm:$0xff]
    %v198 = vld [vmem:[#allocation9 + $0x110] sm:$0xff]
    %v199 = vld [vmem:[#allocation9 + $0x118] sm:$0xff]
    %v200 = vld [vmem:[#allocation9 + $0x120] sm:$0xff]
    %v201 = vld [vmem:[#allocation9 + $0x128] sm:$0xff]
    %v202 = vld [vmem:[#allocation9 + $0x130] sm:$0xff]
    %v203 = vld [vmem:[#allocation9 + $0x138] sm:$0xff]
    %v204 = vld [vmem:[#allocation9 + $0x140] sm:$0xff]
    %v205 = vld [vmem:[#allocation9 + $0x148] sm:$0xff]
    %v206 = vld [vmem:[#allocation9 + $0x150] sm:$0xff]
    %v207 = vld [vmem:[#allocation9 + $0x158] sm:$0xff]
    %v208 = vld [vmem:[#allocation9 + $0x160] sm:$0xff]
    %v209 = vld [vmem:[#allocation9 + $0x168] sm:$0xff]
    %v210 = vld [vmem:[#allocation9 + $0x170] sm:$0xff]
    %v211 = vld [vmem:[#allocation9 + $0x178] sm:$0xff]
    %v212 = vld [vmem:[#allocation9 + $0x180] sm:$0xff]
    %v213 = vld [vmem:[#allocation9 + $0x188] sm:$0xff]
    %v214 = vld [vmem:[#allocation9 + $0x190] sm:$0xff]
    %v215 = vld [vmem:[#allocation9 + $0x198] sm:$0xff]
    %v216 = vld [vmem:[#allocation9 + $0x1a0] sm:$0xff]
    %v217 = vld [vmem:[#allocation9 + $0x1a8] sm:$0xff]
    %v218 = vld [vmem:[#allocation9 + $0x1b0] sm:$0xff]
    %v219 = vld [vmem:[#allocation9 + $0x1b8] sm:$0xff]
    %v220 = vld [vmem:[#allocation9 + $0x1c0] sm:$0xff]
    %v221 = vld [vmem:[#allocation9 + $0x1c8] sm:$0xff]
    %v222 = vld [vmem:[#allocation9 + $0x1d0] sm:$0xff]
    %v223 = vld [vmem:[#allocation9 + $0x1d8] sm:$0xff]
    %v224 = vld [vmem:[#allocation9 + $0x1e0] sm:$0xff]
    %v225 = vld [vmem:[#allocation9 + $0x1e8] sm:$0xff]
    %v226 = vld [vmem:[#allocation9 + $0x1f0] sm:$0xff]
    %v227 = vld [vmem:[#allocation9 + $0x1f8] sm:$0xff]
    %v228 = vld [vmem:[#allocation9 + $0x200] sm:$0xff]
    %v229 = vld [vmem:[#allocation9 + $0x208] sm:$0xff]
    %v230 = vld [vmem:[#allocation9 + $0x210] sm:$0xff]
    %v231 = vld [vmem:[#allocation9 + $0x218] sm:$0xff]
    %v232 = vld [vmem:[#allocation9 + $0x220] sm:$0xff]
    %v233 = vld [vmem:[#allocation9 + $0x228] sm:$0xff]
    %v234 = vld [vmem:[#allocation9 + $0x230] sm:$0xff]
    %v235 = vld [vmem:[#allocation9 + $0x238] sm:$0xff]
    %v236 = vld [vmem:[#allocation9 + $0x240] sm:$0xff]
    %v237 = vld [vmem:[#allocation9 + $0x248] sm:$0xff]
    %v238 = vld [vmem:[#allocation9 + $0x250] sm:$0xff]
    %v239 = vld [vmem:[#allocation9 + $0x258] sm:$0xff]
    %v240 = vld [vmem:[#allocation9 + $0x260] sm:$0xff]
    %v241 = vld [vmem:[#allocation9 + $0x268] sm:$0xff]
    %v242 = vld [vmem:[#allocation9 + $0x270] sm:$0xff]
    %v243 = vld [vmem:[#allocation9 + $0x278] sm:$0xff]
    %v244 = vld [vmem:[#allocation9 + $0x280] sm:$0xff]
    %v245 = vld [vmem:[#allocation9 + $0x288] sm:$0xff]
    %v246 = vld [vmem:[#allocation9 + $0x290] sm:$0xff]
    %v247 = vld [vmem:[#allocation9 + $0x298] sm:$0xff]
    %v248 = vld [vmem:[#allocation9 + $0x2a0] sm:$0xff]
    %v249 = vld [vmem:[#allocation9 + $0x2a8] sm:$0xff]
    %v250 = vld [vmem:[#allocation9 + $0x2b0] sm:$0xff]
    %v251 = vld [vmem:[#allocation9 + $0x2b8] sm:$0xff]
    %v252 = vld [vmem:[#allocation9 + $0x2c0] sm:$0xff]
    %v253 = vld [vmem:[#allocation9 + $0x2c8] sm:$0xff]
    %v254 = vld [vmem:[#allocation9 + $0x2d0] sm:$0xff]
    %v255 = vld [vmem:[#allocation9 + $0x2d8] sm:$0xff]
    %v256 = vld [vmem:[#allocation9 + $0x2e0] sm:$0xff]
    %v257 = vld [vmem:[#allocation9 + $0x2e8] sm:$0xff]
    %v258 = vld [vmem:[#allocation9 + $0x2f0] sm:$0xff]
    %v259 = vld [vmem:[#allocation9 + $0x2f8] sm:$0xff]
    %v260 = vld [vmem:[#allocation9 + $0x300] sm:$0xff]
    %v261 = vld [vmem:[#allocation9 + $0x308] sm:$0xff]
    %v262 = vld [vmem:[#allocation9 + $0x310] sm:$0xff]
    %v263 = vld [vmem:[#allocation9 + $0x318] sm:$0xff]
    %v264 = vld [vmem:[#allocation9 + $0x320] sm:$0xff]
    %v265 = vld [vmem:[#allocation9 + $0x328] sm:$0xff]
    %v266 = vld [vmem:[#allocation9 + $0x330] sm:$0xff]
    %v267 = vld [vmem:[#allocation9 + $0x338] sm:$0xff]
    %v268 = vld [vmem:[#allocation9 + $0x340] sm:$0xff]
    %v269 = vld [vmem:[#allocation9 + $0x348] sm:$0xff]
    %v270 = vld [vmem:[#allocation9 + $0x350] sm:$0xff]
    %v271 = vld [vmem:[#allocation9 + $0x358] sm:$0xff]
    %v272 = vld [vmem:[#allocation9 + $0x360] sm:$0xff]
    %v273 = vld [vmem:[#allocation9 + $0x368] sm:$0xff]
    %v274 = vld [vmem:[#allocation9 + $0x370] sm:$0xff]
    %v275 = vld [vmem:[#allocation9 + $0x378] sm:$0xff]
    %v276 = vld [vmem:[#allocation9 + $0x380] sm:$0xff]
    %v277 = vld [vmem:[#allocation9 + $0x388] sm:$0xff]
    %v278 = vld [vmem:[#allocation9 + $0x390] sm:$0xff]
    %v279 = vld [vmem:[#allocation9 + $0x398] sm:$0xff]
    %v280 = vld [vmem:[#allocation9 + $0x3a0] sm:$0xff]
    %v281 = vld [vmem:[#allocation9 + $0x3a8] sm:$0xff]
    %v282 = vld [vmem:[#allocation9 + $0x3b0] sm:$0xff]
    %v283 = vld [vmem:[#allocation9 + $0x3b8] sm:$0xff]
    %v284 = vld [vmem:[#allocation9 + $0x3c0] sm:$0xff]
    %v285 = vld [vmem:[#allocation9 + $0x3c8] sm:$0xff]
    %v286 = vld [vmem:[#allocation9 + $0x3d0] sm:$0xff]
    %v287 = vld [vmem:[#allocation9 + $0x3d8] sm:$0xff]
    %v288 = vld [vmem:[#allocation9 + $0x3e0] sm:$0xff]
    %v289 = vld [vmem:[#allocation9 + $0x3e8] sm:$0xff]
    %v290 = vld [vmem:[#allocation9 + $0x3f0] sm:$0xff]
    %v291 = vld [vmem:[#allocation9 + $0x3f8] sm:$0xff]
    %v292 = vld [vmem:[#allocation9 + $0x400] sm:$0xff]
    %v293 = vld [vmem:[#allocation9 + $0x408] sm:$0xff]
    %v294 = vld [vmem:[#allocation9 + $0x410] sm:$0xff]
    %v295 = vld [vmem:[#allocation9 + $0x418] sm:$0xff]
    %v296 = vld [vmem:[#allocation9 + $0x420] sm:$0xff]
    %v297 = vld [vmem:[#allocation9 + $0x428] sm:$0xff]
    %v298 = vld [vmem:[#allocation9 + $0x430] sm:$0xff]
    %v299 = vld [vmem:[#allocation9 + $0x438] sm:$0xff]
    %v300 = vld [vmem:[#allocation9 + $0x440] sm:$0xff]
    %v301 = vld [vmem:[#allocation9 + $0x448] sm:$0xff]
    %v302 = vld [vmem:[#allocation9 + $0x450] sm:$0xff]
    %v303 = vld [vmem:[#allocation9 + $0x458] sm:$0xff]
    %v304 = vld [vmem:[#allocation9 + $0x460] sm:$0xff]
    %v305 = vld [vmem:[#allocation9 + $0x468] sm:$0xff]
    %v306 = vld [vmem:[#allocation9 + $0x470] sm:$0xff]
    %v307 = vld [vmem:[#allocation9 + $0x478] sm:$0xff]
    %v308 = vld [vmem:[#allocation9 + $0x480] sm:$0xff]
    %v309 = vld [vmem:[#allocation9 + $0x488] sm:$0xff]
    %v310 = vld [vmem:[#allocation9 + $0x490] sm:$0xff]
    %v311 = vld [vmem:[#allocation9 + $0x498] sm:$0xff]
    %v312 = vld [vmem:[#allocation9 + $0x4a0] sm:$0xff]
    %v313 = vld [vmem:[#allocation9 + $0x4a8] sm:$0xff]
    %v314 = vld [vmem:[#allocation9 + $0x4b0] sm:$0xff]
    %v315 = vld [vmem:[#allocation9 + $0x4b8] sm:$0xff]
    %v316 = vld [vmem:[#allocation9 + $0x4c0] sm:$0xff]
    %v317 = vld [vmem:[#allocation9 + $0x4c8] sm:$0xff]
    %v318 = vld [vmem:[#allocation9 + $0x4d0] sm:$0xff]
    %v319 = vld [vmem:[#allocation9 + $0x4d8] sm:$0xff]
    %v320 = vld [vmem:[#allocation9 + $0x4e0] sm:$0xff]
    %v321 = vld [vmem:[#allocation9 + $0x4e8] sm:$0xff]
    %v322 = vld [vmem:[#allocation9 + $0x4f0] sm:$0xff]
    %v323 = vld [vmem:[#allocation9 + $0x4f8] sm:$0xff]
    %v324 = vld [vmem:[#allocation9 + $0x500] sm:$0xff]
    %v325 = vld [vmem:[#allocation9 + $0x508] sm:$0xff]
    %v326 = vld [vmem:[#allocation9 + $0x510] sm:$0xff]
    %v327 = vld [vmem:[#allocation9 + $0x518] sm:$0xff]
    %v328 = vld [vmem:[#allocation9 + $0x520] sm:$0xff]
    %v329 = vld [vmem:[#allocation9 + $0x528] sm:$0xff]
    %v330 = vld [vmem:[#allocation9 + $0x530] sm:$0xff]
    %v331 = vld [vmem:[#allocation9 + $0x538] sm:$0xff]
    %v332 = vld [vmem:[#allocation9 + $0x540] sm:$0xff]
    %v333 = vld [vmem:[#allocation9 + $0x548] sm:$0xff]
    %v334 = vld [vmem:[#allocation9 + $0x550] sm:$0xff]
    %v335 = vld [vmem:[#allocation9 + $0x558] sm:$0xff]
    %v336 = vld [vmem:[#allocation9 + $0x560] sm:$0xff]
    %v337 = vld [vmem:[#allocation9 + $0x568] sm:$0xff]
    %v338 = vld [vmem:[#allocation9 + $0x570] sm:$0xff]
    %v339 = vld [vmem:[#allocation9 + $0x578] sm:$0xff]
    %v340 = vld [vmem:[#allocation9 + $0x580] sm:$0xff]
    %v341 = vld [vmem:[#allocation9 + $0x588] sm:$0xff]
    %v342 = vld [vmem:[#allocation9 + $0x590] sm:$0xff]
    %v343 = vld [vmem:[#allocation9 + $0x598] sm:$0xff]
    %v344 = vld [vmem:[#allocation9 + $0x5a0] sm:$0xff]
    %v345 = vld [vmem:[#allocation9 + $0x5a8] sm:$0xff]
    %v346 = vld [vmem:[#allocation9 + $0x5b0] sm:$0xff]
    %v347 = vld [vmem:[#allocation9 + $0x5b8] sm:$0xff]
    %v348 = vld [vmem:[#allocation9 + $0x5c0] sm:$0xff]
    %v349 = vld [vmem:[#allocation9 + $0x5c8] sm:$0xff]
    %v350 = vld [vmem:[#allocation9 + $0x5d0] sm:$0xff]
    %v351 = vld [vmem:[#allocation9 + $0x5d8] sm:$0xff]
    %v352 = vld [vmem:[#allocation9 + $0x5e0] sm:$0xff]
    %v353 = vld [vmem:[#allocation9 + $0x5e8] sm:$0xff]
    %v354 = vld [vmem:[#allocation9 + $0x5f0] sm:$0xff]
    %v355 = vld [vmem:[#allocation9 + $0x5f8] sm:$0xff]
    %v356 = vld [vmem:[#allocation9 + $0x600] sm:$0xff]
    %v357 = vld [vmem:[#allocation9 + $0x608] sm:$0xff]
    %v358 = vld [vmem:[#allocation9 + $0x610] sm:$0xff]
    %v359 = vld [vmem:[#allocation9 + $0x618] sm:$0xff]
    %v360 = vld [vmem:[#allocation9 + $0x620] sm:$0xff]
    %v361 = vld [vmem:[#allocation9 + $0x628] sm:$0xff]
    %v362 = vld [vmem:[#allocation9 + $0x630] sm:$0xff]
    %v363 = vld [vmem:[#allocation9 + $0x638] sm:$0xff]
    %v364 = vld [vmem:[#allocation9 + $0x640] sm:$0xff]
    %v365 = vld [vmem:[#allocation9 + $0x648] sm:$0xff]
    %v366 = vld [vmem:[#allocation9 + $0x650] sm:$0xff]
    %v367 = vld [vmem:[#allocation9 + $0x658] sm:$0xff]
    %v368 = vld [vmem:[#allocation9 + $0x660] sm:$0xff]
    %v369 = vld [vmem:[#allocation9 + $0x668] sm:$0xff]
    %v370 = vld [vmem:[#allocation9 + $0x670] sm:$0xff]
    %v371 = vld [vmem:[#allocation9 + $0x678] sm:$0xff]
    %v372 = vld [vmem:[#allocation9 + $0x680] sm:$0xff]
    %v373 = vld [vmem:[#allocation9 + $0x688] sm:$0xff]
    %v374 = vld [vmem:[#allocation9 + $0x690] sm:$0xff]
    %v375 = vld [vmem:[#allocation9 + $0x698] sm:$0xff]
    %v376 = vld [vmem:[#allocation9 + $0x6a0] sm:$0xff]
    %v377 = vld [vmem:[#allocation9 + $0x6a8] sm:$0xff]
    %v378 = vld [vmem:[#allocation9 + $0x6b0] sm:$0xff]
    %v379 = vld [vmem:[#allocation9 + $0x6b8] sm:$0xff]
    %v380 = vld [vmem:[#allocation9 + $0x6c0] sm:$0xff]
    %v381 = vld [vmem:[#allocation9 + $0x6c8] sm:$0xff]
    %v382 = vld [vmem:[#allocation9 + $0x6d0] sm:$0xff]
    %v383 = vld [vmem:[#allocation9 + $0x6d8] sm:$0xff]
    %v384 = vld [vmem:[#allocation9 + $0x6e0] sm:$0xff]
    %v385 = vld [vmem:[#allocation9 + $0x6e8] sm:$0xff]
    %v386 = vld [vmem:[#allocation9 + $0x6f0] sm:$0xff]
    %v387 = vld [vmem:[#allocation9 + $0x6f8] sm:$0xff]
    %v388 = vld [vmem:[#allocation9 + $0x700] sm:$0xff]
    %v389 = vld [vmem:[#allocation9 + $0x708] sm:$0xff]
    %v390 = vld [vmem:[#allocation9 + $0x710] sm:$0xff]
    %v391 = vld [vmem:[#allocation9 + $0x718] sm:$0xff]
    %v392 = vld [vmem:[#allocation9 + $0x720] sm:$0xff]
    %v393 = vld [vmem:[#allocation9 + $0x728] sm:$0xff]
    %v394 = vld [vmem:[#allocation9 + $0x730] sm:$0xff]
    %v395 = vld [vmem:[#allocation9 + $0x738] sm:$0xff]
    %v396 = vld [vmem:[#allocation9 + $0x740] sm:$0xff]
    %v397 = vld [vmem:[#allocation9 + $0x748] sm:$0xff]
    %v398 = vld [vmem:[#allocation9 + $0x750] sm:$0xff]
    %v399 = vld [vmem:[#allocation9 + $0x758] sm:$0xff]
    %v400 = vld [vmem:[#allocation9 + $0x760] sm:$0xff]
    %v401 = vld [vmem:[#allocation9 + $0x768] sm:$0xff]
    %v402 = vld [vmem:[#allocation9 + $0x770] sm:$0xff]
    %v403 = vld [vmem:[#allocation9 + $0x778] sm:$0xff]
    %v404 = vld [vmem:[#allocation9 + $0x780] sm:$0xff]
    %v405 = vld [vmem:[#allocation9 + $0x788] sm:$0xff]
    %v406 = vld [vmem:[#allocation9 + $0x790] sm:$0xff]
    %v407 = vld [vmem:[#allocation9 + $0x798] sm:$0xff]
    %v408 = vld [vmem:[#allocation9 + $0x7a0] sm:$0xff]
    %v409 = vld [vmem:[#allocation9 + $0x7a8] sm:$0xff]
    %v410 = vld [vmem:[#allocation9 + $0x7b0] sm:$0xff]
    %v411 = vld [vmem:[#allocation9 + $0x7b8] sm:$0xff]
    %v412 = vld [vmem:[#allocation9 + $0x7c0] sm:$0xff]
    %v413 = vld [vmem:[#allocation9 + $0x7c8] sm:$0xff]
    %v414 = vld [vmem:[#allocation9 + $0x7d0] sm:$0xff]
    %v415 = vld [vmem:[#allocation9 + $0x7d8] sm:$0xff]
    %v416 = vld [vmem:[#allocation9 + $0x7e0] sm:$0xff]
    %v417 = vld [vmem:[#allocation9 + $0x7e8] sm:$0xff]
    %v418 = vld [vmem:[#allocation9 + $0x7f0] sm:$0xff]
    %v419 = vld [vmem:[#allocation9 + $0x7f8] sm:$0xff]
    %v420 = vld [vmem:[#allocation9 + $0x800] sm:$0xff]
    %v421 = vld [vmem:[#allocation9 + $0x808] sm:$0xff]
    %v422 = vld [vmem:[#allocation9 + $0x810] sm:$0xff]
    %v423 = vld [vmem:[#allocation9 + $0x818] sm:$0xff]
    %v424 = vld [vmem:[#allocation9 + $0x820] sm:$0xff]
    %v425 = vld [vmem:[#allocation9 + $0x828] sm:$0xff]
    %v426 = vld [vmem:[#allocation9 + $0x830] sm:$0xff]
    %v427 = vld [vmem:[#allocation9 + $0x838] sm:$0xff]
    %v428 = vld [vmem:[#allocation9 + $0x840] sm:$0xff]
    %v429 = vld [vmem:[#allocation9 + $0x848] sm:$0xff]
    %v430 = vld [vmem:[#allocation9 + $0x850] sm:$0xff]
    %v431 = vld [vmem:[#allocation9 + $0x858] sm:$0xff]
    %v432 = vld [vmem:[#allocation9 + $0x860] sm:$0xff]
    %v433 = vld [vmem:[#allocation9 + $0x868] sm:$0xff]
    %v434 = vld [vmem:[#allocation9 + $0x870] sm:$0xff]
    %v435 = vld [vmem:[#allocation9 + $0x878] sm:$0xff]
    %v436 = vld [vmem:[#allocation9 + $0x880] sm:$0xff]
    %v437 = vld [vmem:[#allocation9 + $0x888] sm:$0xff]
    %v438 = vld [vmem:[#allocation9 + $0x890] sm:$0xff]
    %v439 = vld [vmem:[#allocation9 + $0x898] sm:$0xff]
    %v440 = vld [vmem:[#allocation9 + $0x8a0] sm:$0xff]
    %v441 = vld [vmem:[#allocation9 + $0x8a8] sm:$0xff]
    %v442 = vld [vmem:[#allocation9 + $0x8b0] sm:$0xff]
    %v443 = vld [vmem:[#allocation9 + $0x8b8] sm:$0xff]
    %v444 = vld [vmem:[#allocation9 + $0x8c0] sm:$0xff]
    %v445 = vld [vmem:[#allocation9 + $0x8c8] sm:$0xff]
    %v446 = vld [vmem:[#allocation9 + $0x8d0] sm:$0xff]
    %v447 = vld [vmem:[#allocation9 + $0x8d8] sm:$0xff]
    %v448 = vld [vmem:[#allocation9 + $0x8e0] sm:$0xff]
    %v449 = vld [vmem:[#allocation9 + $0x8e8] sm:$0xff]
    %v450 = vld [vmem:[#allocation9 + $0x8f0] sm:$0xff]
    %v451 = vld [vmem:[#allocation9 + $0x8f8] sm:$0xff]
    %v740 = vunpack.c.l.b16 %v164
    %v741 = vunpack.c.h.b16 %v164
    %v742 = vunpack.c.l.b16 %v165
    %v743 = vunpack.c.h.b16 %v165
    %v744 = vunpack.c.l.b16 %v166
    %v745 = vunpack.c.h.b16 %v166
    %v746 = vunpack.c.l.b16 %v167
    %v747 = vunpack.c.h.b16 %v167
    %v748 = vunpack.c.l.b16 %v168
    %v749 = vunpack.c.h.b16 %v168
    %v750 = vunpack.c.l.b16 %v169
    %v751 = vunpack.c.h.b16 %v169
    %v752 = vunpack.c.l.b16 %v170
    %v753 = vunpack.c.h.b16 %v170
    %v754 = vunpack.c.l.b16 %v171
    %v755 = vunpack.c.h.b16 %v171
    %v756 = vunpack.c.l.b16 %v172
    %v757 = vunpack.c.h.b16 %v172
    %v758 = vunpack.c.l.b16 %v173
    %v759 = vunpack.c.h.b16 %v173
    %v760 = vunpack.c.l.b16 %v174
    %v761 = vunpack.c.h.b16 %v174
    %v762 = vunpack.c.l.b16 %v175
    %v763 = vunpack.c.h.b16 %v175
    %v764 = vunpack.c.l.b16 %v176
    %v765 = vunpack.c.h.b16 %v176
    %v766 = vunpack.c.l.b16 %v177
    %v767 = vunpack.c.h.b16 %v177
    %v768 = vunpack.c.l.b16 %v178
    %v769 = vunpack.c.h.b16 %v178
    %v770 = vunpack.c.l.b16 %v179
    %v771 = vunpack.c.h.b16 %v179
    %v772 = vunpack.c.l.b16 %v180
    %v773 = vunpack.c.h.b16 %v180
    %v774 = vunpack.c.l.b16 %v181
    %v775 = vunpack.c.h.b16 %v181
    %v776 = vunpack.c.l.b16 %v182
    %v777 = vunpack.c.h.b16 %v182
    %v778 = vunpack.c.l.b16 %v183
    %v779 = vunpack.c.h.b16 %v183
    %v780 = vunpack.c.l.b16 %v184
    %v781 = vunpack.c.h.b16 %v184
    %v782 = vunpack.c.l.b16 %v185
    %v783 = vunpack.c.h.b16 %v185
    %v784 = vunpack.c.l.b16 %v186
    %v785 = vunpack.c.h.b16 %v186
    %v786 = vunpack.c.l.b16 %v187
    %v787 = vunpack.c.h.b16 %v187
    %v788 = vunpack.c.l.b16 %v188
    %v789 = vunpack.c.h.b16 %v188
    %v790 = vunpack.c.l.b16 %v189
    %v791 = vunpack.c.h.b16 %v189
    %v792 = vunpack.c.l.b16 %v190
    %v793 = vunpack.c.h.b16 %v190
    %v794 = vunpack.c.l.b16 %v191
    %v795 = vunpack.c.h.b16 %v191
    %v796 = vunpack.c.l.b16 %v192
    %v797 = vunpack.c.h.b16 %v192
    %v798 = vunpack.c.l.b16 %v193
    %v799 = vunpack.c.h.b16 %v193
    %v800 = vunpack.c.l.b16 %v194
    %v801 = vunpack.c.h.b16 %v194
    %v802 = vunpack.c.l.b16 %v195
    %v803 = vunpack.c.h.b16 %v195
    %v804 = vunpack.c.l.b16 %v196
    %v805 = vunpack.c.h.b16 %v196
    %v806 = vunpack.c.l.b16 %v197
    %v807 = vunpack.c.h.b16 %v197
    %v808 = vunpack.c.l.b16 %v198
    %v809 = vunpack.c.h.b16 %v198
    %v810 = vunpack.c.l.b16 %v199
    %v811 = vunpack.c.h.b16 %v199
    %v812 = vunpack.c.l.b16 %v200
    %v813 = vunpack.c.h.b16 %v200
    %v814 = vunpack.c.l.b16 %v201
    %v815 = vunpack.c.h.b16 %v201
    %v816 = vunpack.c.l.b16 %v202
    %v817 = vunpack.c.h.b16 %v202
    %v818 = vunpack.c.l.b16 %v203
    %v819 = vunpack.c.h.b16 %v203
    %v820 = vunpack.c.l.b16 %v204
    %v821 = vunpack.c.h.b16 %v204
    %v822 = vunpack.c.l.b16 %v205
    %v823 = vunpack.c.h.b16 %v205
    %v824 = vunpack.c.l.b16 %v206
    %v825 = vunpack.c.h.b16 %v206
    %v826 = vunpack.c.l.b16 %v207
    %v827 = vunpack.c.h.b16 %v207
    %v828 = vunpack.c.l.b16 %v208
    %v829 = vunpack.c.h.b16 %v208
    %v830 = vunpack.c.l.b16 %v209
    %v831 = vunpack.c.h.b16 %v209
    %v832 = vunpack.c.l.b16 %v210
    %v833 = vunpack.c.h.b16 %v210
    %v834 = vunpack.c.l.b16 %v211
    %v835 = vunpack.c.h.b16 %v211
    %v836 = vunpack.c.l.b16 %v212
    %v837 = vunpack.c.h.b16 %v212
    %v838 = vunpack.c.l.b16 %v213
    %v839 = vunpack.c.h.b16 %v213
    %v840 = vunpack.c.l.b16 %v214
    %v841 = vunpack.c.h.b16 %v214
    %v842 = vunpack.c.l.b16 %v215
    %v843 = vunpack.c.h.b16 %v215
    %v844 = vunpack.c.l.b16 %v216
    %v845 = vunpack.c.h.b16 %v216
    %v846 = vunpack.c.l.b16 %v217
    %v847 = vunpack.c.h.b16 %v217
    %v848 = vunpack.c.l.b16 %v218
    %v849 = vunpack.c.h.b16 %v218
    %v850 = vunpack.c.l.b16 %v219
    %v851 = vunpack.c.h.b16 %v219
    %v852 = vunpack.c.l.b16 %v220
    %v853 = vunpack.c.h.b16 %v220
    %v854 = vunpack.c.l.b16 %v221
    %v855 = vunpack.c.h.b16 %v221
    %v856 = vunpack.c.l.b16 %v222
    %v857 = vunpack.c.h.b16 %v222
    %v858 = vunpack.c.l.b16 %v223
    %v859 = vunpack.c.h.b16 %v223
    %v860 = vunpack.c.l.b16 %v224
    %v861 = vunpack.c.h.b16 %v224
    %v862 = vunpack.c.l.b16 %v225
    %v863 = vunpack.c.h.b16 %v225
    %v864 = vunpack.c.l.b16 %v226
    %v865 = vunpack.c.h.b16 %v226
    %v866 = vunpack.c.l.b16 %v227
    %v867 = vunpack.c.h.b16 %v227
    %v868 = vunpack.c.l.b16 %v228
    %v869 = vunpack.c.h.b16 %v228
    %v870 = vunpack.c.l.b16 %v229
    %v871 = vunpack.c.h.b16 %v229
    %v872 = vunpack.c.l.b16 %v230
    %v873 = vunpack.c.h.b16 %v230
    %v874 = vunpack.c.l.b16 %v231
    %v875 = vunpack.c.h.b16 %v231
    %v876 = vunpack.c.l.b16 %v232
    %v877 = vunpack.c.h.b16 %v232
    %v878 = vunpack.c.l.b16 %v233
    %v879 = vunpack.c.h.b16 %v233
    %v880 = vunpack.c.l.b16 %v234
    %v881 = vunpack.c.h.b16 %v234
    %v882 = vunpack.c.l.b16 %v235
    %v883 = vunpack.c.h.b16 %v235
    %v884 = vunpack.c.l.b16 %v236
    %v885 = vunpack.c.h.b16 %v236
    %v886 = vunpack.c.l.b16 %v237
    %v887 = vunpack.c.h.b16 %v237
    %v888 = vunpack.c.l.b16 %v238
    %v889 = vunpack.c.h.b16 %v238
    %v890 = vunpack.c.l.b16 %v239
    %v891 = vunpack.c.h.b16 %v239
    %v892 = vunpack.c.l.b16 %v240
    %v893 = vunpack.c.h.b16 %v240
    %v894 = vunpack.c.l.b16 %v241
    %v895 = vunpack.c.h.b16 %v241
    %v896 = vunpack.c.l.b16 %v242
    %v897 = vunpack.c.h.b16 %v242
    %v898 = vunpack.c.l.b16 %v243
    %v899 = vunpack.c.h.b16 %v243
    %v900 = vunpack.c.l.b16 %v244
    %v901 = vunpack.c.h.b16 %v244
    %v902 = vunpack.c.l.b16 %v245
    %v903 = vunpack.c.h.b16 %v245
    %v904 = vunpack.c.l.b16 %v246
    %v905 = vunpack.c.h.b16 %v246
    %v906 = vunpack.c.l.b16 %v247
    %v907 = vunpack.c.h.b16 %v247
    %v908 = vunpack.c.l.b16 %v248
    %v909 = vunpack.c.h.b16 %v248
    %v910 = vunpack.c.l.b16 %v249
    %v911 = vunpack.c.h.b16 %v249
    %v912 = vunpack.c.l.b16 %v250
    %v913 = vunpack.c.h.b16 %v250
    %v914 = vunpack.c.l.b16 %v251
    %v915 = vunpack.c.h.b16 %v251
    %v916 = vunpack.c.l.b16 %v252
    %v917 = vunpack.c.h.b16 %v252
    %v918 = vunpack.c.l.b16 %v253
    %v919 = vunpack.c.h.b16 %v253
    %v920 = vunpack.c.l.b16 %v254
    %v921 = vunpack.c.h.b16 %v254
    %v922 = vunpack.c.l.b16 %v255
    %v923 = vunpack.c.h.b16 %v255
    %v924 = vunpack.c.l.b16 %v256
    %v925 = vunpack.c.h.b16 %v256
    %v926 = vunpack.c.l.b16 %v257
    %v927 = vunpack.c.h.b16 %v257
    %v928 = vunpack.c.l.b16 %v258
    %v929 = vunpack.c.h.b16 %v258
    %v930 = vunpack.c.l.b16 %v259
    %v931 = vunpack.c.h.b16 %v259
    %v932 = vunpack.c.l.b16 %v260
    %v933 = vunpack.c.h.b16 %v260
    %v934 = vunpack.c.l.b16 %v261
    %v935 = vunpack.c.h.b16 %v261
    %v936 = vunpack.c.l.b16 %v262
    %v937 = vunpack.c.h.b16 %v262
    %v938 = vunpack.c.l.b16 %v263
    %v939 = vunpack.c.h.b16 %v263
    %v940 = vunpack.c.l.b16 %v264
    %v941 = vunpack.c.h.b16 %v264
    %v942 = vunpack.c.l.b16 %v265
    %v943 = vunpack.c.h.b16 %v265
    %v944 = vunpack.c.l.b16 %v266
    %v945 = vunpack.c.h.b16 %v266
    %v946 = vunpack.c.l.b16 %v267
    %v947 = vunpack.c.h.b16 %v267
    %v948 = vunpack.c.l.b16 %v268
    %v949 = vunpack.c.h.b16 %v268
    %v950 = vunpack.c.l.b16 %v269
    %v951 = vunpack.c.h.b16 %v269
    %v952 = vunpack.c.l.b16 %v270
    %v953 = vunpack.c.h.b16 %v270
    %v954 = vunpack.c.l.b16 %v271
    %v955 = vunpack.c.h.b16 %v271
    %v956 = vunpack.c.l.b16 %v272
    %v957 = vunpack.c.h.b16 %v272
    %v958 = vunpack.c.l.b16 %v273
    %v959 = vunpack.c.h.b16 %v273
    %v960 = vunpack.c.l.b16 %v274
    %v961 = vunpack.c.h.b16 %v274
    %v962 = vunpack.c.l.b16 %v275
    %v963 = vunpack.c.h.b16 %v275
    %v964 = vunpack.c.l.b16 %v276
    %v965 = vunpack.c.h.b16 %v276
    %v966 = vunpack.c.l.b16 %v277
    %v967 = vunpack.c.h.b16 %v277
    %v968 = vunpack.c.l.b16 %v278
    %v969 = vunpack.c.h.b16 %v278
    %v970 = vunpack.c.l.b16 %v279
    %v971 = vunpack.c.h.b16 %v279
    %v972 = vunpack.c.l.b16 %v280
    %v973 = vunpack.c.h.b16 %v280
    %v974 = vunpack.c.l.b16 %v281
    %v975 = vunpack.c.h.b16 %v281
    %v976 = vunpack.c.l.b16 %v282
    %v977 = vunpack.c.h.b16 %v282
    %v978 = vunpack.c.l.b16 %v283
    %v979 = vunpack.c.h.b16 %v283
    %v980 = vunpack.c.l.b16 %v284
    %v981 = vunpack.c.h.b16 %v284
    %v982 = vunpack.c.l.b16 %v285
    %v983 = vunpack.c.h.b16 %v285
    %v984 = vunpack.c.l.b16 %v286
    %v985 = vunpack.c.h.b16 %v286
    %v986 = vunpack.c.l.b16 %v287
    %v987 = vunpack.c.h.b16 %v287
    %v988 = vunpack.c.l.b16 %v288
    %v989 = vunpack.c.h.b16 %v288
    %v990 = vunpack.c.l.b16 %v289
    %v991 = vunpack.c.h.b16 %v289
    %v992 = vunpack.c.l.b16 %v290
    %v993 = vunpack.c.h.b16 %v290
    %v994 = vunpack.c.l.b16 %v291
    %v995 = vunpack.c.h.b16 %v291
    %v996 = vunpack.c.l.b16 %v292
    %v997 = vunpack.c.h.b16 %v292
    %v998 = vunpack.c.l.b16 %v293
    %v999 = vunpack.c.h.b16 %v293
    %v1000 = vunpack.c.l.b16 %v294
    %v1001 = vunpack.c.h.b16 %v294
    %v1002 = vunpack.c.l.b16 %v295
    %v1003 = vunpack.c.h.b16 %v295
    %v1004 = vunpack.c.l.b16 %v296
    %v1005 = vunpack.c.h.b16 %v296
    %v1006 = vunpack.c.l.b16 %v297
    %v1007 = vunpack.c.h.b16 %v297
    %v1008 = vunpack.c.l.b16 %v298
    %v1009 = vunpack.c.h.b16 %v298
    %v1010 = vunpack.c.l.b16 %v299
    %v1011 = vunpack.c.h.b16 %v299
    %v1012 = vunpack.c.l.b16 %v300
    %v1013 = vunpack.c.h.b16 %v300
    %v1014 = vunpack.c.l.b16 %v301
    %v1015 = vunpack.c.h.b16 %v301
    %v1016 = vunpack.c.l.b16 %v302
    %v1017 = vunpack.c.h.b16 %v302
    %v1018 = vunpack.c.l.b16 %v303
    %v1019 = vunpack.c.h.b16 %v303
    %v1020 = vunpack.c.l.b16 %v304
    %v1021 = vunpack.c.h.b16 %v304
    %v1022 = vunpack.c.l.b16 %v305
    %v1023 = vunpack.c.h.b16 %v305
    %v1024 = vunpack.c.l.b16 %v306
    %v1025 = vunpack.c.h.b16 %v306
    %v1026 = vunpack.c.l.b16 %v307
    %v1027 = vunpack.c.h.b16 %v307
    %v1028 = vunpack.c.l.b16 %v308
    %v1029 = vunpack.c.h.b16 %v308
    %v1030 = vunpack.c.l.b16 %v309
    %v1031 = vunpack.c.h.b16 %v309
    %v1032 = vunpack.c.l.b16 %v310
    %v1033 = vunpack.c.h.b16 %v310
    %v1034 = vunpack.c.l.b16 %v311
    %v1035 = vunpack.c.h.b16 %v311
    %v1036 = vunpack.c.l.b16 %v312
    %v1037 = vunpack.c.h.b16 %v312
    %v1038 = vunpack.c.l.b16 %v313
    %v1039 = vunpack.c.h.b16 %v313
    %v1040 = vunpack.c.l.b16 %v314
    %v1041 = vunpack.c.h.b16 %v314
    %v1042 = vunpack.c.l.b16 %v315
    %v1043 = vunpack.c.h.b16 %v315
    %v1044 = vunpack.c.l.b16 %v316
    %v1045 = vunpack.c.h.b16 %v316
    %v1046 = vunpack.c.l.b16 %v317
    %v1047 = vunpack.c.h.b16 %v317
    %v1048 = vunpack.c.l.b16 %v318
    %v1049 = vunpack.c.h.b16 %v318
    %v1050 = vunpack.c.l.b16 %v319
    %v1051 = vunpack.c.h.b16 %v319
    %v1052 = vunpack.c.l.b16 %v320
    %v1053 = vunpack.c.h.b16 %v320
    %v1054 = vunpack.c.l.b16 %v321
    %v1055 = vunpack.c.h.b16 %v321
    %v1056 = vunpack.c.l.b16 %v322
    %v1057 = vunpack.c.h.b16 %v322
    %v1058 = vunpack.c.l.b16 %v323
    %v1059 = vunpack.c.h.b16 %v323
    %v1060 = vunpack.c.l.b16 %v324
    %v1061 = vunpack.c.h.b16 %v324
    %v1062 = vunpack.c.l.b16 %v325
    %v1063 = vunpack.c.h.b16 %v325
    %v1064 = vunpack.c.l.b16 %v326
    %v1065 = vunpack.c.h.b16 %v326
    %v1066 = vunpack.c.l.b16 %v327
    %v1067 = vunpack.c.h.b16 %v327
    %v1068 = vunpack.c.l.b16 %v328
    %v1069 = vunpack.c.h.b16 %v328
    %v1070 = vunpack.c.l.b16 %v329
    %v1071 = vunpack.c.h.b16 %v329
    %v1072 = vunpack.c.l.b16 %v330
    %v1073 = vunpack.c.h.b16 %v330
    %v1074 = vunpack.c.l.b16 %v331
    %v1075 = vunpack.c.h.b16 %v331
    %v1076 = vunpack.c.l.b16 %v332
    %v1077 = vunpack.c.h.b16 %v332
    %v1078 = vunpack.c.l.b16 %v333
    %v1079 = vunpack.c.h.b16 %v333
    %v1080 = vunpack.c.l.b16 %v334
    %v1081 = vunpack.c.h.b16 %v334
    %v1082 = vunpack.c.l.b16 %v335
    %v1083 = vunpack.c.h.b16 %v335
    %v1084 = vunpack.c.l.b16 %v336
    %v1085 = vunpack.c.h.b16 %v336
    %v1086 = vunpack.c.l.b16 %v337
    %v1087 = vunpack.c.h.b16 %v337
    %v1088 = vunpack.c.l.b16 %v338
    %v1089 = vunpack.c.h.b16 %v338
    %v1090 = vunpack.c.l.b16 %v339
    %v1091 = vunpack.c.h.b16 %v339
    %v1092 = vunpack.c.l.b16 %v340
    %v1093 = vunpack.c.h.b16 %v340
    %v1094 = vunpack.c.l.b16 %v341
    %v1095 = vunpack.c.h.b16 %v341
    %v1096 = vunpack.c.l.b16 %v342
    %v1097 = vunpack.c.h.b16 %v342
    %v1098 = vunpack.c.l.b16 %v343
    %v1099 = vunpack.c.h.b16 %v343
    %v1100 = vunpack.c.l.b16 %v344
    %v1101 = vunpack.c.h.b16 %v344
    %v1102 = vunpack.c.l.b16 %v345
    %v1103 = vunpack.c.h.b16 %v345
    %v1104 = vunpack.c.l.b16 %v346
    %v1105 = vunpack.c.h.b16 %v346
    %v1106 = vunpack.c.l.b16 %v347
    %v1107 = vunpack.c.h.b16 %v347
    %v1108 = vunpack.c.l.b16 %v348
    %v1109 = vunpack.c.h.b16 %v348
    %v1110 = vunpack.c.l.b16 %v349
    %v1111 = vunpack.c.h.b16 %v349
    %v1112 = vunpack.c.l.b16 %v350
    %v1113 = vunpack.c.h.b16 %v350
    %v1114 = vunpack.c.l.b16 %v351
    %v1115 = vunpack.c.h.b16 %v351
    %v1116 = vunpack.c.l.b16 %v352
    %v1117 = vunpack.c.h.b16 %v352
    %v1118 = vunpack.c.l.b16 %v353
    %v1119 = vunpack.c.h.b16 %v353
    %v1120 = vunpack.c.l.b16 %v354
    %v1121 = vunpack.c.h.b16 %v354
    %v1122 = vunpack.c.l.b16 %v355
    %v1123 = vunpack.c.h.b16 %v355
    %v1124 = vunpack.c.l.b16 %v356
    %v1125 = vunpack.c.h.b16 %v356
    %v1126 = vunpack.c.l.b16 %v357
    %v1127 = vunpack.c.h.b16 %v357
    %v1128 = vunpack.c.l.b16 %v358
    %v1129 = vunpack.c.h.b16 %v358
    %v1130 = vunpack.c.l.b16 %v359
    %v1131 = vunpack.c.h.b16 %v359
    %v1132 = vunpack.c.l.b16 %v360
    %v1133 = vunpack.c.h.b16 %v360
    %v1134 = vunpack.c.l.b16 %v361
    %v1135 = vunpack.c.h.b16 %v361
    %v1136 = vunpack.c.l.b16 %v362
    %v1137 = vunpack.c.h.b16 %v362
    %v1138 = vunpack.c.l.b16 %v363
    %v1139 = vunpack.c.h.b16 %v363
    %v1140 = vunpack.c.l.b16 %v364
    %v1141 = vunpack.c.h.b16 %v364
    %v1142 = vunpack.c.l.b16 %v365
    %v1143 = vunpack.c.h.b16 %v365
    %v1144 = vunpack.c.l.b16 %v366
    %v1145 = vunpack.c.h.b16 %v366
    %v1146 = vunpack.c.l.b16 %v367
    %v1147 = vunpack.c.h.b16 %v367
    %v1148 = vunpack.c.l.b16 %v368
    %v1149 = vunpack.c.h.b16 %v368
    %v1150 = vunpack.c.l.b16 %v369
    %v1151 = vunpack.c.h.b16 %v369
    %v1152 = vunpack.c.l.b16 %v370
    %v1153 = vunpack.c.h.b16 %v370
    %v1154 = vunpack.c.l.b16 %v371
    %v1155 = vunpack.c.h.b16 %v371
    %v1156 = vunpack.c.l.b16 %v372
    %v1157 = vunpack.c.h.b16 %v372
    %v1158 = vunpack.c.l.b16 %v373
    %v1159 = vunpack.c.h.b16 %v373
    %v1160 = vunpack.c.l.b16 %v374
    %v1161 = vunpack.c.h.b16 %v374
    %v1162 = vunpack.c.l.b16 %v375
    %v1163 = vunpack.c.h.b16 %v375
    %v1164 = vunpack.c.l.b16 %v376
    %v1165 = vunpack.c.h.b16 %v376
    %v1166 = vunpack.c.l.b16 %v377
    %v1167 = vunpack.c.h.b16 %v377
    %v1168 = vunpack.c.l.b16 %v378
    %v1169 = vunpack.c.h.b16 %v378
    %v1170 = vunpack.c.l.b16 %v379
    %v1171 = vunpack.c.h.b16 %v379
    %v1172 = vunpack.c.l.b16 %v380
    %v1173 = vunpack.c.h.b16 %v380
    %v1174 = vunpack.c.l.b16 %v381
    %v1175 = vunpack.c.h.b16 %v381
    %v1176 = vunpack.c.l.b16 %v382
    %v1177 = vunpack.c.h.b16 %v382
    %v1178 = vunpack.c.l.b16 %v383
    %v1179 = vunpack.c.h.b16 %v383
    %v1180 = vunpack.c.l.b16 %v384
    %v1181 = vunpack.c.h.b16 %v384
    %v1182 = vunpack.c.l.b16 %v385
    %v1183 = vunpack.c.h.b16 %v385
    %v1184 = vunpack.c.l.b16 %v386
    %v1185 = vunpack.c.h.b16 %v386
    %v1186 = vunpack.c.l.b16 %v387
    %v1187 = vunpack.c.h.b16 %v387
    %v1188 = vunpack.c.l.b16 %v388
    %v1189 = vunpack.c.h.b16 %v388
    %v1190 = vunpack.c.l.b16 %v389
    %v1191 = vunpack.c.h.b16 %v389
    %v1192 = vunpack.c.l.b16 %v390
    %v1193 = vunpack.c.h.b16 %v390
    %v1194 = vunpack.c.l.b16 %v391
    %v1195 = vunpack.c.h.b16 %v391
    %v1196 = vunpack.c.l.b16 %v392
    %v1197 = vunpack.c.h.b16 %v392
    %v1198 = vunpack.c.l.b16 %v393
    %v1199 = vunpack.c.h.b16 %v393
    %v1200 = vunpack.c.l.b16 %v394
    %v1201 = vunpack.c.h.b16 %v394
    %v1202 = vunpack.c.l.b16 %v395
    %v1203 = vunpack.c.h.b16 %v395
    %v1204 = vunpack.c.l.b16 %v396
    %v1205 = vunpack.c.h.b16 %v396
    %v1206 = vunpack.c.l.b16 %v397
    %v1207 = vunpack.c.h.b16 %v397
    %v1208 = vunpack.c.l.b16 %v398
    %v1209 = vunpack.c.h.b16 %v398
    %v1210 = vunpack.c.l.b16 %v399
    %v1211 = vunpack.c.h.b16 %v399
    %v1212 = vunpack.c.l.b16 %v400
    %v1213 = vunpack.c.h.b16 %v400
    %v1214 = vunpack.c.l.b16 %v401
    %v1215 = vunpack.c.h.b16 %v401
    %v1216 = vunpack.c.l.b16 %v402
    %v1217 = vunpack.c.h.b16 %v402
    %v1218 = vunpack.c.l.b16 %v403
    %v1219 = vunpack.c.h.b16 %v403
    %v1220 = vunpack.c.l.b16 %v404
    %v1221 = vunpack.c.h.b16 %v404
    %v1222 = vunpack.c.l.b16 %v405
    %v1223 = vunpack.c.h.b16 %v405
    %v1224 = vunpack.c.l.b16 %v406
    %v1225 = vunpack.c.h.b16 %v406
    %v1226 = vunpack.c.l.b16 %v407
    %v1227 = vunpack.c.h.b16 %v407
    %v1228 = vunpack.c.l.b16 %v408
    %v1229 = vunpack.c.h.b16 %v408
    %v1230 = vunpack.c.l.b16 %v409
    %v1231 = vunpack.c.h.b16 %v409
    %v1232 = vunpack.c.l.b16 %v410
    %v1233 = vunpack.c.h.b16 %v410
    %v1234 = vunpack.c.l.b16 %v411
    %v1235 = vunpack.c.h.b16 %v411
    %v1236 = vunpack.c.l.b16 %v412
    %v1237 = vunpack.c.h.b16 %v412
    %v1238 = vunpack.c.l.b16 %v413
    %v1239 = vunpack.c.h.b16 %v413
    %v1240 = vunpack.c.l.b16 %v414
    %v1241 = vunpack.c.h.b16 %v414
    %v1242 = vunpack.c.l.b16 %v415
    %v1243 = vunpack.c.h.b16 %v415
    %v1244 = vunpack.c.l.b16 %v416
    %v1245 = vunpack.c.h.b16 %v416
    %v1246 = vunpack.c.l.b16 %v417
    %v1247 = vunpack.c.h.b16 %v417
    %v1248 = vunpack.c.l.b16 %v418
    %v1249 = vunpack.c.h.b16 %v418
    %v1250 = vunpack.c.l.b16 %v419
    %v1251 = vunpack.c.h.b16 %v419
    %v1252 = vunpack.c.l.b16 %v420
    %v1253 = vunpack.c.h.b16 %v420
    %v1254 = vunpack.c.l.b16 %v421
    %v1255 = vunpack.c.h.b16 %v421
    %v1256 = vunpack.c.l.b16 %v422
    %v1257 = vunpack.c.h.b16 %v422
    %v1258 = vunpack.c.l.b16 %v423
    %v1259 = vunpack.c.h.b16 %v423
    %v1260 = vunpack.c.l.b16 %v424
    %v1261 = vunpack.c.h.b16 %v424
    %v1262 = vunpack.c.l.b16 %v425
    %v1263 = vunpack.c.h.b16 %v425
    %v1264 = vunpack.c.l.b16 %v426
    %v1265 = vunpack.c.h.b16 %v426
    %v1266 = vunpack.c.l.b16 %v427
    %v1267 = vunpack.c.h.b16 %v427
    %v1268 = vunpack.c.l.b16 %v428
    %v1269 = vunpack.c.h.b16 %v428
    %v1270 = vunpack.c.l.b16 %v429
    %v1271 = vunpack.c.h.b16 %v429
    %v1272 = vunpack.c.l.b16 %v430
    %v1273 = vunpack.c.h.b16 %v430
    %v1274 = vunpack.c.l.b16 %v431
    %v1275 = vunpack.c.h.b16 %v431
    %v1276 = vunpack.c.l.b16 %v432
    %v1277 = vunpack.c.h.b16 %v432
    %v1278 = vunpack.c.l.b16 %v433
    %v1279 = vunpack.c.h.b16 %v433
    %v1280 = vunpack.c.l.b16 %v434
    %v1281 = vunpack.c.h.b16 %v434
    %v1282 = vunpack.c.l.b16 %v435
    %v1283 = vunpack.c.h.b16 %v435
    %v1284 = vunpack.c.l.b16 %v436
    %v1285 = vunpack.c.h.b16 %v436
    %v1286 = vunpack.c.l.b16 %v437
    %v1287 = vunpack.c.h.b16 %v437
    %v1288 = vunpack.c.l.b16 %v438
    %v1289 = vunpack.c.h.b16 %v438
    %v1290 = vunpack.c.l.b16 %v439
    %v1291 = vunpack.c.h.b16 %v439
    %v1292 = vunpack.c.l.b16 %v440
    %v1293 = vunpack.c.h.b16 %v440
    %v1294 = vunpack.c.l.b16 %v441
    %v1295 = vunpack.c.h.b16 %v441
    %v1296 = vunpack.c.l.b16 %v442
    %v1297 = vunpack.c.h.b16 %v442
    %v1298 = vunpack.c.l.b16 %v443
    %v1299 = vunpack.c.h.b16 %v443
    %v1300 = vunpack.c.l.b16 %v444
    %v1301 = vunpack.c.h.b16 %v444
    %v1302 = vunpack.c.l.b16 %v445
    %v1303 = vunpack.c.h.b16 %v445
    %v1304 = vunpack.c.l.b16 %v446
    %v1305 = vunpack.c.h.b16 %v446
    %v1306 = vunpack.c.l.b16 %v447
    %v1307 = vunpack.c.h.b16 %v447
    %v1308 = vunpack.c.l.b16 %v448
    %v1309 = vunpack.c.h.b16 %v448
    %v1310 = vunpack.c.l.b16 %v449
    %v1311 = vunpack.c.h.b16 %v449
    %v1312 = vunpack.c.l.b16 %v450
    %v1313 = vunpack.c.h.b16 %v450
    %v1314 = vunpack.c.l.b16 %v451
    %v1315 = vunpack.c.h.b16 %v451
    %v1316 = vpack.c.b16 %v746, %v740
    %v1317 = vpack.c.b16 %v747, %v741
    %v1318 = vpack.c.b16 %v748, %v742
    %v1319 = vpack.c.b16 %v749, %v743
    %v1320 = vpack.c.b16 %v750, %v744
    %v1321 = vpack.c.b16 %v751, %v745
    %v1322 = vpack.c.b16 %v758, %v752
    %v1323 = vpack.c.b16 %v759, %v753
    %v1324 = vpack.c.b16 %v760, %v754
    %v1325 = vpack.c.b16 %v761, %v755
    %v1326 = vpack.c.b16 %v762, %v756
    %v1327 = vpack.c.b16 %v763, %v757
    %v1328 = vpack.c.b16 %v770, %v764
    %v1329 = vpack.c.b16 %v771, %v765
    %v1330 = vpack.c.b16 %v772, %v766
    %v1331 = vpack.c.b16 %v773, %v767
    %v1332 = vpack.c.b16 %v774, %v768
    %v1333 = vpack.c.b16 %v775, %v769
    %v1334 = vpack.c.b16 %v782, %v776
    %v1335 = vpack.c.b16 %v783, %v777
    %v1336 = vpack.c.b16 %v784, %v778
    %v1337 = vpack.c.b16 %v785, %v779
    %v1338 = vpack.c.b16 %v786, %v780
    %v1339 = vpack.c.b16 %v787, %v781
    %v1340 = vpack.c.b16 %v794, %v788
    %v1341 = vpack.c.b16 %v795, %v789
    %v1342 = vpack.c.b16 %v796, %v790
    %v1343 = vpack.c.b16 %v797, %v791
    %v1344 = vpack.c.b16 %v798, %v792
    %v1345 = vpack.c.b16 %v799, %v793
    %v1346 = vpack.c.b16 %v806, %v800
    %v1347 = vpack.c.b16 %v807, %v801
    %v1348 = vpack.c.b16 %v808, %v802
    %v1349 = vpack.c.b16 %v809, %v803
    %v1350 = vpack.c.b16 %v810, %v804
    %v1351 = vpack.c.b16 %v811, %v805
    %v1352 = vpack.c.b16 %v818, %v812
    %v1353 = vpack.c.b16 %v819, %v813
    %v1354 = vpack.c.b16 %v820, %v814
    %v1355 = vpack.c.b16 %v821, %v815
    %v1356 = vpack.c.b16 %v822, %v816
    %v1357 = vpack.c.b16 %v823, %v817
    %v1358 = vpack.c.b16 %v830, %v824
    %v1359 = vpack.c.b16 %v831, %v825
    %v1360 = vpack.c.b16 %v832, %v826
    %v1361 = vpack.c.b16 %v833, %v827
    %v1362 = vpack.c.b16 %v834, %v828
    %v1363 = vpack.c.b16 %v835, %v829
    %v1364 = vpack.c.b16 %v842, %v836
    %v1365 = vpack.c.b16 %v843, %v837
    %v1366 = vpack.c.b16 %v844, %v838
    %v1367 = vpack.c.b16 %v845, %v839
    %v1368 = vpack.c.b16 %v846, %v840
    %v1369 = vpack.c.b16 %v847, %v841
    %v1370 = vpack.c.b16 %v854, %v848
    %v1371 = vpack.c.b16 %v855, %v849
    %v1372 = vpack.c.b16 %v856, %v850
    %v1373 = vpack.c.b16 %v857, %v851
    %v1374 = vpack.c.b16 %v858, %v852
    %v1375 = vpack.c.b16 %v859, %v853
    %v1376 = vpack.c.b16 %v866, %v860
    %v1377 = vpack.c.b16 %v867, %v861
    %v1378 = vpack.c.b16 %v868, %v862
    %v1379 = vpack.c.b16 %v869, %v863
    %v1380 = vpack.c.b16 %v870, %v864
    %v1381 = vpack.c.b16 %v871, %v865
    %v1382 = vpack.c.b16 %v878, %v872
    %v1383 = vpack.c.b16 %v879, %v873
    %v1384 = vpack.c.b16 %v880, %v874
    %v1385 = vpack.c.b16 %v881, %v875
    %v1386 = vpack.c.b16 %v882, %v876
    %v1387 = vpack.c.b16 %v883, %v877
    %v1388 = vpack.c.b16 %v890, %v884
    %v1389 = vpack.c.b16 %v891, %v885
    %v1390 = vpack.c.b16 %v892, %v886
    %v1391 = vpack.c.b16 %v893, %v887
    %v1392 = vpack.c.b16 %v894, %v888
    %v1393 = vpack.c.b16 %v895, %v889
    %v1394 = vpack.c.b16 %v902, %v896
    %v1395 = vpack.c.b16 %v903, %v897
    %v1396 = vpack.c.b16 %v904, %v898
    %v1397 = vpack.c.b16 %v905, %v899
    %v1398 = vpack.c.b16 %v906, %v900
    %v1399 = vpack.c.b16 %v907, %v901
    %v1400 = vpack.c.b16 %v914, %v908
    %v1401 = vpack.c.b16 %v915, %v909
    %v1402 = vpack.c.b16 %v916, %v910
    %v1403 = vpack.c.b16 %v917, %v911
    %v1404 = vpack.c.b16 %v918, %v912
    %v1405 = vpack.c.b16 %v919, %v913
    %v1406 = vpack.c.b16 %v926, %v920
    %v1407 = vpack.c.b16 %v927, %v921
    %v1408 = vpack.c.b16 %v928, %v922
    %v1409 = vpack.c.b16 %v929, %v923
    %v1410 = vpack.c.b16 %v930, %v924
    %v1411 = vpack.c.b16 %v931, %v925
    %v1412 = vpack.c.b16 %v938, %v932
    %v1413 = vpack.c.b16 %v939, %v933
    %v1414 = vpack.c.b16 %v940, %v934
    %v1415 = vpack.c.b16 %v941, %v935
    %v1416 = vpack.c.b16 %v942, %v936
    %v1417 = vpack.c.b16 %v943, %v937
    %v1418 = vpack.c.b16 %v950, %v944
    %v1419 = vpack.c.b16 %v951, %v945
    %v1420 = vpack.c.b16 %v952, %v946
    %v1421 = vpack.c.b16 %v953, %v947
    %v1422 = vpack.c.b16 %v954, %v948
    %v1423 = vpack.c.b16 %v955, %v949
    %v1424 = vpack.c.b16 %v962, %v956
    %v1425 = vpack.c.b16 %v963, %v957
    %v1426 = vpack.c.b16 %v964, %v958
    %v1427 = vpack.c.b16 %v965, %v959
    %v1428 = vpack.c.b16 %v966, %v960
    %v1429 = vpack.c.b16 %v967, %v961
    %v1430 = vpack.c.b16 %v974, %v968
    %v1431 = vpack.c.b16 %v975, %v969
    %v1432 = vpack.c.b16 %v976, %v970
    %v1433 = vpack.c.b16 %v977, %v971
    %v1434 = vpack.c.b16 %v978, %v972
    %v1435 = vpack.c.b16 %v979, %v973
    %v1436 = vpack.c.b16 %v986, %v980
    %v1437 = vpack.c.b16 %v987, %v981
    %v1438 = vpack.c.b16 %v988, %v982
    %v1439 = vpack.c.b16 %v989, %v983
    %v1440 = vpack.c.b16 %v990, %v984
    %v1441 = vpack.c.b16 %v991, %v985
    %v1442 = vpack.c.b16 %v998, %v992
    %v1443 = vpack.c.b16 %v999, %v993
    %v1444 = vpack.c.b16 %v1000, %v994
    %v1445 = vpack.c.b16 %v1001, %v995
    %v1446 = vpack.c.b16 %v1002, %v996
    %v1447 = vpack.c.b16 %v1003, %v997
    %v1448 = vpack.c.b16 %v1010, %v1004
    %v1449 = vpack.c.b16 %v1011, %v1005
    %v1450 = vpack.c.b16 %v1012, %v1006
    %v1451 = vpack.c.b16 %v1013, %v1007
    %v1452 = vpack.c.b16 %v1014, %v1008
    %v1453 = vpack.c.b16 %v1015, %v1009
    %v1454 = vpack.c.b16 %v1022, %v1016
    %v1455 = vpack.c.b16 %v1023, %v1017
    %v1456 = vpack.c.b16 %v1024, %v1018
    %v1457 = vpack.c.b16 %v1025, %v1019
    %v1458 = vpack.c.b16 %v1026, %v1020
    %v1459 = vpack.c.b16 %v1027, %v1021
    %v1460 = vpack.c.b16 %v1034, %v1028
    %v1461 = vpack.c.b16 %v1035, %v1029
    %v1462 = vpack.c.b16 %v1036, %v1030
    %v1463 = vpack.c.b16 %v1037, %v1031
    %v1464 = vpack.c.b16 %v1038, %v1032
    %v1465 = vpack.c.b16 %v1039, %v1033
    %v1466 = vpack.c.b16 %v1046, %v1040
    %v1467 = vpack.c.b16 %v1047, %v1041
    %v1468 = vpack.c.b16 %v1048, %v1042
    %v1469 = vpack.c.b16 %v1049, %v1043
    %v1470 = vpack.c.b16 %v1050, %v1044
    %v1471 = vpack.c.b16 %v1051, %v1045
    %v1472 = vpack.c.b16 %v1058, %v1052
    %v1473 = vpack.c.b16 %v1059, %v1053
    %v1474 = vpack.c.b16 %v1060, %v1054
    %v1475 = vpack.c.b16 %v1061, %v1055
    %v1476 = vpack.c.b16 %v1062, %v1056
    %v1477 = vpack.c.b16 %v1063, %v1057
    %v1478 = vpack.c.b16 %v1070, %v1064
    %v1479 = vpack.c.b16 %v1071, %v1065
    %v1480 = vpack.c.b16 %v1072, %v1066
    %v1481 = vpack.c.b16 %v1073, %v1067
    %v1482 = vpack.c.b16 %v1074, %v1068
    %v1483 = vpack.c.b16 %v1075, %v1069
    %v1484 = vpack.c.b16 %v1082, %v1076
    %v1485 = vpack.c.b16 %v1083, %v1077
    %v1486 = vpack.c.b16 %v1084, %v1078
    %v1487 = vpack.c.b16 %v1085, %v1079
    %v1488 = vpack.c.b16 %v1086, %v1080
    %v1489 = vpack.c.b16 %v1087, %v1081
    %v1490 = vpack.c.b16 %v1094, %v1088
    %v1491 = vpack.c.b16 %v1095, %v1089
    %v1492 = vpack.c.b16 %v1096, %v1090
    %v1493 = vpack.c.b16 %v1097, %v1091
    %v1494 = vpack.c.b16 %v1098, %v1092
    %v1495 = vpack.c.b16 %v1099, %v1093
    %v1496 = vpack.c.b16 %v1106, %v1100
    %v1497 = vpack.c.b16 %v1107, %v1101
    %v1498 = vpack.c.b16 %v1108, %v1102
    %v1499 = vpack.c.b16 %v1109, %v1103
    %v1500 = vpack.c.b16 %v1110, %v1104
    %v1501 = vpack.c.b16 %v1111, %v1105
    %v1502 = vpack.c.b16 %v1118, %v1112
    %v1503 = vpack.c.b16 %v1119, %v1113
    %v1504 = vpack.c.b16 %v1120, %v1114
    %v1505 = vpack.c.b16 %v1121, %v1115
    %v1506 = vpack.c.b16 %v1122, %v1116
    %v1507 = vpack.c.b16 %v1123, %v1117
    %v1508 = vpack.c.b16 %v1130, %v1124
    %v1509 = vpack.c.b16 %v1131, %v1125
    %v1510 = vpack.c.b16 %v1132, %v1126
    %v1511 = vpack.c.b16 %v1133, %v1127
    %v1512 = vpack.c.b16 %v1134, %v1128
    %v1513 = vpack.c.b16 %v1135, %v1129
    %v1514 = vpack.c.b16 %v1142, %v1136
    %v1515 = vpack.c.b16 %v1143, %v1137
    %v1516 = vpack.c.b16 %v1144, %v1138
    %v1517 = vpack.c.b16 %v1145, %v1139
    %v1518 = vpack.c.b16 %v1146, %v1140
    %v1519 = vpack.c.b16 %v1147, %v1141
    %v1520 = vpack.c.b16 %v1154, %v1148
    %v1521 = vpack.c.b16 %v1155, %v1149
    %v1522 = vpack.c.b16 %v1156, %v1150
    %v1523 = vpack.c.b16 %v1157, %v1151
    %v1524 = vpack.c.b16 %v1158, %v1152
    %v1525 = vpack.c.b16 %v1159, %v1153
    %v1526 = vpack.c.b16 %v1166, %v1160
    %v1527 = vpack.c.b16 %v1167, %v1161
    %v1528 = vpack.c.b16 %v1168, %v1162
    %v1529 = vpack.c.b16 %v1169, %v1163
    %v1530 = vpack.c.b16 %v1170, %v1164
    %v1531 = vpack.c.b16 %v1171, %v1165
    %v1532 = vpack.c.b16 %v1178, %v1172
    %v1533 = vpack.c.b16 %v1179, %v1173
    %v1534 = vpack.c.b16 %v1180, %v1174
    %v1535 = vpack.c.b16 %v1181, %v1175
    %v1536 = vpack.c.b16 %v1182, %v1176
    %v1537 = vpack.c.b16 %v1183, %v1177
    %v1538 = vpack.c.b16 %v1190, %v1184
    %v1539 = vpack.c.b16 %v1191, %v1185
    %v1540 = vpack.c.b16 %v1192, %v1186
    %v1541 = vpack.c.b16 %v1193, %v1187
    %v1542 = vpack.c.b16 %v1194, %v1188
    %v1543 = vpack.c.b16 %v1195, %v1189
    %v1544 = vpack.c.b16 %v1202, %v1196
    %v1545 = vpack.c.b16 %v1203, %v1197
    %v1546 = vpack.c.b16 %v1204, %v1198
    %v1547 = vpack.c.b16 %v1205, %v1199
    %v1548 = vpack.c.b16 %v1206, %v1200
    %v1549 = vpack.c.b16 %v1207, %v1201
    %v1550 = vpack.c.b16 %v1214, %v1208
    %v1551 = vpack.c.b16 %v1215, %v1209
    %v1552 = vpack.c.b16 %v1216, %v1210
    %v1553 = vpack.c.b16 %v1217, %v1211
    %v1554 = vpack.c.b16 %v1218, %v1212
    %v1555 = vpack.c.b16 %v1219, %v1213
    %v1556 = vpack.c.b16 %v1226, %v1220
    %v1557 = vpack.c.b16 %v1227, %v1221
    %v1558 = vpack.c.b16 %v1228, %v1222
    %v1559 = vpack.c.b16 %v1229, %v1223
    %v1560 = vpack.c.b16 %v1230, %v1224
    %v1561 = vpack.c.b16 %v1231, %v1225
    %v1562 = vpack.c.b16 %v1238, %v1232
    %v1563 = vpack.c.b16 %v1239, %v1233
    %v1564 = vpack.c.b16 %v1240, %v1234
    %v1565 = vpack.c.b16 %v1241, %v1235
    %v1566 = vpack.c.b16 %v1242, %v1236
    %v1567 = vpack.c.b16 %v1243, %v1237
    %v1568 = vpack.c.b16 %v1250, %v1244
    %v1569 = vpack.c.b16 %v1251, %v1245
    %v1570 = vpack.c.b16 %v1252, %v1246
    %v1571 = vpack.c.b16 %v1253, %v1247
    %v1572 = vpack.c.b16 %v1254, %v1248
    %v1573 = vpack.c.b16 %v1255, %v1249
    %v1574 = vpack.c.b16 %v1262, %v1256
    %v1575 = vpack.c.b16 %v1263, %v1257
    %v1576 = vpack.c.b16 %v1264, %v1258
    %v1577 = vpack.c.b16 %v1265, %v1259
    %v1578 = vpack.c.b16 %v1266, %v1260
    %v1579 = vpack.c.b16 %v1267, %v1261
    %v1580 = vpack.c.b16 %v1274, %v1268
    %v1581 = vpack.c.b16 %v1275, %v1269
    %v1582 = vpack.c.b16 %v1276, %v1270
    %v1583 = vpack.c.b16 %v1277, %v1271
    %v1584 = vpack.c.b16 %v1278, %v1272
    %v1585 = vpack.c.b16 %v1279, %v1273
    %v1586 = vpack.c.b16 %v1286, %v1280
    %v1587 = vpack.c.b16 %v1287, %v1281
    %v1588 = vpack.c.b16 %v1288, %v1282
    %v1589 = vpack.c.b16 %v1289, %v1283
    %v1590 = vpack.c.b16 %v1290, %v1284
    %v1591 = vpack.c.b16 %v1291, %v1285
    %v1592 = vpack.c.b16 %v1298, %v1292
    %v1593 = vpack.c.b16 %v1299, %v1293
    %v1594 = vpack.c.b16 %v1300, %v1294
    %v1595 = vpack.c.b16 %v1301, %v1295
    %v1596 = vpack.c.b16 %v1302, %v1296
    %v1597 = vpack.c.b16 %v1303, %v1297
    %v1598 = vpack.c.b16 %v1310, %v1304
    %v1599 = vpack.c.b16 %v1311, %v1305
    %v1600 = vpack.c.b16 %v1312, %v1306
    %v1601 = vpack.c.b16 %v1313, %v1307
    %v1602 = vpack.c.b16 %v1314, %v1308
    %v1603 = vpack.c.b16 %v1315, %v1309
    %1892 = vmatprep.subr.bf16.mxu0 %v1317
    %1893 = vmatpush1.bf16.msra.mxu0 %v1316
    %1894 = vmatprep.subr.bf16.mxu0 %v1323
    %1895 = vmatpush1.bf16.msra.mxu0 %v1322
    %1896 = vmatprep.subr.bf16.mxu0 %v1329
    %1897 = vmatpush1.bf16.msra.mxu0 %v1328
    %1898 = vmatprep.subr.bf16.mxu0 %v1335
    %1899 = vmatpush1.bf16.msra.mxu0 %v1334
    %1900 = vmatprep.subr.bf16.mxu0 %v1341
    %1901 = vmatpush1.bf16.msra.mxu0 %v1340
    %1902 = vmatprep.subr.bf16.mxu0 %v1347
    %1903 = vmatpush1.bf16.msra.mxu0 %v1346
    %1904 = vmatprep.subr.bf16.mxu0 %v1353
    %1905 = vmatpush1.bf16.msra.mxu0 %v1352
    %1906 = vmatprep.subr.bf16.mxu0 %v1359
    %1907 = vmatpush1.bf16.msra.mxu0 %v1358
    %1908 = vmatprep.subr.bf16.mxu0 %v1365
    %1909 = vmatpush1.bf16.msra.mxu0 %v1364
    %1910 = vmatprep.subr.bf16.mxu0 %v1371
    %1911 = vmatpush1.bf16.msra.mxu0 %v1370
    %1912 = vmatprep.subr.bf16.mxu0 %v1377
    %1913 = vmatpush1.bf16.msra.mxu0 %v1376
    %1914 = vmatprep.subr.bf16.mxu0 %v1383
    %1915 = vmatpush1.bf16.msra.mxu0 %v1382
    %1916 = vmatprep.subr.bf16.mxu0 %v1389
    %1917 = vmatpush1.bf16.msra.mxu0 %v1388
    %1918 = vmatprep.subr.bf16.mxu0 %v1395
    %1919 = vmatpush1.bf16.msra.mxu0 %v1394
    %1920 = vmatprep.subr.bf16.mxu0 %v1401
    %1921 = vmatpush1.bf16.msra.mxu0 %v1400
    %1922 = vmatprep.subr.bf16.mxu0 %v1407
    %1923 = vmatpush1.bf16.msra.mxu0 %v1406
    %1924 = vmatprep.mubr.bf16.mxu0 %v148
    %1925 = vmatmul.mubr.bf16.gmra.mrb[0].mxu0 %v147
    %v1926 = vpop.f32.mrb[0].mxu0
    %v1927 = vadd.f32 0.0, %v1926
    %v1928 = vpop.f32.mrb[0].mxu0
    %v1929 = vadd.f32 0.0, %v1928
    %v1930 = vpop.f32.mrb[0].mxu0
    %v1931 = vadd.f32 0.0, %v1930
    %v1932 = vpop.f32.mrb[0].mxu0
    %v1933 = vadd.f32 0.0, %v1932
    %1934 = vdwg.mxu0
    %1935 = vmatprep.subr.bf16.mxu0 %v1413
    %1936 = vmatpush1.bf16.msra.mxu0 %v1412
    %1937 = vmatprep.subr.bf16.mxu0 %v1419
    %1938 = vmatpush1.bf16.msra.mxu0 %v1418
    %1939 = vmatprep.subr.bf16.mxu0 %v1425
    %1940 = vmatpush1.bf16.msra.mxu0 %v1424
    %1941 = vmatprep.subr.bf16.mxu0 %v1431
    %1942 = vmatpush1.bf16.msra.mxu0 %v1430
    %1943 = vmatprep.subr.bf16.mxu0 %v1437
    %1944 = vmatpush1.bf16.msra.mxu0 %v1436
    %1945 = vmatprep.subr.bf16.mxu0 %v1443
    %1946 = vmatpush1.bf16.msra.mxu0 %v1442
    %1947 = vmatprep.subr.bf16.mxu0 %v1449
    %1948 = vmatpush1.bf16.msra.mxu0 %v1448
    %1949 = vmatprep.subr.bf16.mxu0 %v1455
    %1950 = vmatpush1.bf16.msra.mxu0 %v1454
    %1951 = vmatprep.subr.bf16.mxu0 %v1461
    %1952 = vmatpush1.bf16.msra.mxu0 %v1460
    %1953 = vmatprep.subr.bf16.mxu0 %v1467
    %1954 = vmatpush1.bf16.msra.mxu0 %v1466
    %1955 = vmatprep.subr.bf16.mxu0 %v1473
    %1956 = vmatpush1.bf16.msra.mxu0 %v1472
    %1957 = vmatprep.subr.bf16.mxu0 %v1479
    %1958 = vmatpush1.bf16.msra.mxu0 %v1478
    %1959 = vmatprep.subr.bf16.mxu0 %v1485
    %1960 = vmatpush1.bf16.msra.mxu0 %v1484
    %1961 = vmatprep.subr.bf16.mxu0 %v1491
    %1962 = vmatpush1.bf16.msra.mxu0 %v1490
    %1963 = vmatprep.subr.bf16.mxu0 %v1497
    %1964 = vmatpush1.bf16.msra.mxu0 %v1496
    %1965 = vmatprep.subr.bf16.mxu0 %v1503
    %1966 = vmatpush1.bf16.msra.mxu0 %v1502
    %1967 = vmatprep.mubr.bf16.mxu0 %v150
    %1968 = vmatmul.mubr.bf16.gmra.mrb[0].mxu0 %v149
    %v1969 = vpop.f32.mrb[0].mxu0
    %v1970 = vadd.f32 %v1927, %v1969
    %v1971 = vpop.f32.mrb[0].mxu0
    %v1972 = vadd.f32 %v1929, %v1971
    %v1973 = vpop.f32.mrb[0].mxu0
    %v1974 = vadd.f32 %v1931, %v1973
    %v1975 = vpop.f32.mrb[0].mxu0
    %v1976 = vadd.f32 %v1933, %v1975
    %1977 = vdwg.mxu0
    %1978 = vmatprep.subr.bf16.mxu0 %v1509
    %1979 = vmatpush1.bf16.msra.mxu0 %v1508
    %1980 = vmatprep.subr.bf16.mxu0 %v1515
    %1981 = vmatpush1.bf16.msra.mxu0 %v1514
    %1982 = vmatprep.subr.bf16.mxu0 %v1521
    %1983 = vmatpush1.bf16.msra.mxu0 %v1520
    %1984 = vmatprep.subr.bf16.mxu0 %v1527
    %1985 = vmatpush1.bf16.msra.mxu0 %v1526
    %1986 = vmatprep.subr.bf16.mxu0 %v1533
    %1987 = vmatpush1.bf16.msra.mxu0 %v1532
    %1988 = vmatprep.subr.bf16.mxu0 %v1539
    %1989 = vmatpush1.bf16.msra.mxu0 %v1538
    %1990 = vmatprep.subr.bf16.mxu0 %v1545
    %1991 = vmatpush1.bf16.msra.mxu0 %v1544
    %1992 = vmatprep.subr.bf16.mxu0 %v1551
    %1993 = vmatpush1.bf16.msra.mxu0 %v1550
    %1994 = vmatprep.subr.bf16.mxu0 %v1557
    %1995 = vmatpush1.bf16.msra.mxu0 %v1556
    %1996 = vmatprep.subr.bf16.mxu0 %v1563
    %1997 = vmatpush1.bf16.msra.mxu0 %v1562
    %1998 = vmatprep.subr.bf16.mxu0 %v1569
    %1999 = vmatpush1.bf16.msra.mxu0 %v1568
    %2000 = vmatprep.subr.bf16.mxu0 %v1575
    %2001 = vmatpush1.bf16.msra.mxu0 %v1574
    %2002 = vmatprep.subr.bf16.mxu0 %v1581
    %2003 = vmatpush1.bf16.msra.mxu0 %v1580
    %2004 = vmatprep.subr.bf16.mxu0 %v1587
    %2005 = vmatpush1.bf16.msra.mxu0 %v1586
    %2006 = vmatprep.subr.bf16.mxu0 %v1593
    %2007 = vmatpush1.bf16.msra.mxu0 %v1592
    %2008 = vmatprep.subr.bf16.mxu0 %v1599
    %2009 = vmatpush1.bf16.msra.mxu0 %v1598
    %2010 = vmatprep.mubr.bf16.mxu0 %v152
    %2011 = vmatmul.mubr.bf16.gmra.mrb[0].mxu0 %v151
    %v2012 = vpop.f32.mrb[0].mxu0
    %v2013 = vadd.f32 %v1970, %v2012
    %v2014 = vpop.f32.mrb[0].mxu0
    %v2015 = vadd.f32 %v1972, %v2014
    %v2016 = vpop.f32.mrb[0].mxu0
    %v2017 = vadd.f32 %v1974, %v2016
    %v2018 = vpop.f32.mrb[0].mxu0
    %v2019 = vadd.f32 %v1976, %v2018
    %2020 = vdwg.mxu0
    %2021 = vmatprep.subr.bf16.mxu0 %v1319
    %2022 = vmatpush1.bf16.msra.mxu0 %v1318
    %2023 = vmatprep.subr.bf16.mxu0 %v1325
    %2024 = vmatpush1.bf16.msra.mxu0 %v1324
    %2025 = vmatprep.subr.bf16.mxu0 %v1331
    %2026 = vmatpush1.bf16.msra.mxu0 %v1330
    %2027 = vmatprep.subr.bf16.mxu0 %v1337
    %2028 = vmatpush1.bf16.msra.mxu0 %v1336
    %2029 = vmatprep.subr.bf16.mxu0 %v1343
    %2030 = vmatpush1.bf16.msra.mxu0 %v1342
    %2031 = vmatprep.subr.bf16.mxu0 %v1349
    %2032 = vmatpush1.bf16.msra.mxu0 %v1348
    %2033 = vmatprep.subr.bf16.mxu0 %v1355
    %2034 = vmatpush1.bf16.msra.mxu0 %v1354
    %2035 = vmatprep.subr.bf16.mxu0 %v1361
    %2036 = vmatpush1.bf16.msra.mxu0 %v1360
    %2037 = vmatprep.subr.bf16.mxu0 %v1367
    %2038 = vmatpush1.bf16.msra.mxu0 %v1366
    %2039 = vmatprep.subr.bf16.mxu0 %v1373
    %2040 = vmatpush1.bf16.msra.mxu0 %v1372
    %2041 = vmatprep.subr.bf16.mxu0 %v1379
    %2042 = vmatpush1.bf16.msra.mxu0 %v1378
    %2043 = vmatprep.subr.bf16.mxu0 %v1385
    %2044 = vmatpush1.bf16.msra.mxu0 %v1384
    %2045 = vmatprep.subr.bf16.mxu0 %v1391
    %2046 = vmatpush1.bf16.msra.mxu0 %v1390
    %2047 = vmatprep.subr.bf16.mxu0 %v1397
    %2048 = vmatpush1.bf16.msra.mxu0 %v1396
    %2049 = vmatprep.subr.bf16.mxu0 %v1403
    %2050 = vmatpush1.bf16.msra.mxu0 %v1402
    %2051 = vmatprep.subr.bf16.mxu0 %v1409
    %2052 = vmatpush1.bf16.msra.mxu0 %v1408
    %2053 = vmatprep.mubr.bf16.mxu0 %v148
    %2054 = vmatmul.mubr.bf16.gmra.mrb[0].mxu0 %v147
    %v2055 = vpop.f32.mrb[0].mxu0
    %v2056 = vadd.f32 0.0, %v2055
    %v2057 = vpop.f32.mrb[0].mxu0
    %v2058 = vadd.f32 0.0, %v2057
    %v2059 = vpop.f32.mrb[0].mxu0
    %v2060 = vadd.f32 0.0, %v2059
    %v2061 = vpop.f32.mrb[0].mxu0
    %v2062 = vadd.f32 0.0, %v2061
    %2063 = vdwg.mxu0
    %2064 = vmatprep.subr.bf16.mxu0 %v1415
    %2065 = vmatpush1.bf16.msra.mxu0 %v1414
    %2066 = vmatprep.subr.bf16.mxu0 %v1421
    %2067 = vmatpush1.bf16.msra.mxu0 %v1420
    %2068 = vmatprep.subr.bf16.mxu0 %v1427
    %2069 = vmatpush1.bf16.msra.mxu0 %v1426
    %2070 = vmatprep.subr.bf16.mxu0 %v1433
    %2071 = vmatpush1.bf16.msra.mxu0 %v1432
    %2072 = vmatprep.subr.bf16.mxu0 %v1439
    %2073 = vmatpush1.bf16.msra.mxu0 %v1438
    %2074 = vmatprep.subr.bf16.mxu0 %v1445
    %2075 = vmatpush1.bf16.msra.mxu0 %v1444
    %2076 = vmatprep.subr.bf16.mxu0 %v1451
    %2077 = vmatpush1.bf16.msra.mxu0 %v1450
    %2078 = vmatprep.subr.bf16.mxu0 %v1457
    %2079 = vmatpush1.bf16.msra.mxu0 %v1456
    %2080 = vmatprep.subr.bf16.mxu0 %v1463
    %2081 = vmatpush1.bf16.msra.mxu0 %v1462
    %2082 = vmatprep.subr.bf16.mxu0 %v1469
    %2083 = vmatpush1.bf16.msra.mxu0 %v1468
    %2084 = vmatprep.subr.bf16.mxu0 %v1475
    %2085 = vmatpush1.bf16.msra.mxu0 %v1474
    %2086 = vmatprep.subr.bf16.mxu0 %v1481
    %2087 = vmatpush1.bf16.msra.mxu0 %v1480
    %2088 = vmatprep.subr.bf16.mxu0 %v1487
    %2089 = vmatpush1.bf16.msra.mxu0 %v1486
    %2090 = vmatprep.subr.bf16.mxu0 %v1493
    %2091 = vmatpush1.bf16.msra.mxu0 %v1492
    %2092 = vmatprep.subr.bf16.mxu0 %v1499
    %2093 = vmatpush1.bf16.msra.mxu0 %v1498
    %2094 = vmatprep.subr.bf16.mxu0 %v1505
    %2095 = vmatpush1.bf16.msra.mxu0 %v1504
    %2096 = vmatprep.mubr.bf16.mxu0 %v150
    %2097 = vmatmul.mubr.bf16.gmra.mrb[0].mxu0 %v149
    %v2098 = vpop.f32.mrb[0].mxu0
    %v2099 = vadd.f32 %v2056, %v2098
    %v2100 = vpop.f32.mrb[0].mxu0
    %v2101 = vadd.f32 %v2058, %v2100
    %v2102 = vpop.f32.mrb[0].mxu0
    %v2103 = vadd.f32 %v2060, %v2102
    %v2104 = vpop.f32.mrb[0].mxu0
    %v2105 = vadd.f32 %v2062, %v2104
    %2106 = vdwg.mxu0
    %2107 = vmatprep.subr.bf16.mxu0 %v1511
    %2108 = vmatpush1.bf16.msra.mxu0 %v1510
    %2109 = vmatprep.subr.bf16.mxu0 %v1517
    %2110 = vmatpush1.bf16.msra.mxu0 %v1516
    %2111 = vmatprep.subr.bf16.mxu0 %v1523
    %2112 = vmatpush1.bf16.msra.mxu0 %v1522
    %2113 = vmatprep.subr.bf16.mxu0 %v1529
    %2114 = vmatpush1.bf16.msra.mxu0 %v1528
    %2115 = vmatprep.subr.bf16.mxu0 %v1535
    %2116 = vmatpush1.bf16.msra.mxu0 %v1534
    %2117 = vmatprep.subr.bf16.mxu0 %v1541
    %2118 = vmatpush1.bf16.msra.mxu0 %v1540
    %2119 = vmatprep.subr.bf16.mxu0 %v1547
    %2120 = vmatpush1.bf16.msra.mxu0 %v1546
    %2121 = vmatprep.subr.bf16.mxu0 %v1553
    %2122 = vmatpush1.bf16.msra.mxu0 %v1552
    %2123 = vmatprep.subr.bf16.mxu0 %v1559
    %2124 = vmatpush1.bf16.msra.mxu0 %v1558
    %2125 = vmatprep.subr.bf16.mxu0 %v1565
    %2126 = vmatpush1.bf16.msra.mxu0 %v1564
    %2127 = vmatprep.subr.bf16.mxu0 %v1571
    %2128 = vmatpush1.bf16.msra.mxu0 %v1570
    %2129 = vmatprep.subr.bf16.mxu0 %v1577
    %2130 = vmatpush1.bf16.msra.mxu0 %v1576
    %2131 = vmatprep.subr.bf16.mxu0 %v1583
    %2132 = vmatpush1.bf16.msra.mxu0 %v1582
    %2133 = vmatprep.subr.bf16.mxu0 %v1589
    %2134 = vmatpush1.bf16.msra.mxu0 %v1588
    %2135 = vmatprep.subr.bf16.mxu0 %v1595
    %2136 = vmatpush1.bf16.msra.mxu0 %v1594
    %2137 = vmatprep.subr.bf16.mxu0 %v1601
    %2138 = vmatpush1.bf16.msra.mxu0 %v1600
    %2139 = vmatprep.mubr.bf16.mxu0 %v152
    %2140 = vmatmul.mubr.bf16.gmra.mrb[0].mxu0 %v151
    %v2141 = vpop.f32.mrb[0].mxu0
    %v2142 = vadd.f32 %v2099, %v2141
    %v2143 = vpop.f32.mrb[0].mxu0
    %v2144 = vadd.f32 %v2101, %v2143
    %v2145 = vpop.f32.mrb[0].mxu0
    %v2146 = vadd.f32 %v2103, %v2145
    %v2147 = vpop.f32.mrb[0].mxu0
    %v2148 = vadd.f32 %v2105, %v2147
    %2149 = vdwg.mxu0
    %2150 = vmatprep.subr.bf16.mxu0 %v1321
    %2151 = vmatpush1.bf16.msra.mxu0 %v1320
    %2152 = vmatprep.subr.bf16.mxu0 %v1327
    %2153 = vmatpush1.bf16.msra.mxu0 %v1326
    %2154 = vmatprep.subr.bf16.mxu0 %v1333
    %2155 = vmatpush1.bf16.msra.mxu0 %v1332
    %2156 = vmatprep.subr.bf16.mxu0 %v1339
    %2157 = vmatpush1.bf16.msra.mxu0 %v1338
    %2158 = vmatprep.subr.bf16.mxu0 %v1345
    %2159 = vmatpush1.bf16.msra.mxu0 %v1344
    %2160 = vmatprep.subr.bf16.mxu0 %v1351
    %2161 = vmatpush1.bf16.msra.mxu0 %v1350
    %2162 = vmatprep.subr.bf16.mxu0 %v1357
    %2163 = vmatpush1.bf16.msra.mxu0 %v1356
    %2164 = vmatprep.subr.bf16.mxu0 %v1363
    %2165 = vmatpush1.bf16.msra.mxu0 %v1362
    %2166 = vmatprep.subr.bf16.mxu0 %v1369
    %2167 = vmatpush1.bf16.msra.mxu0 %v1368
    %2168 = vmatprep.subr.bf16.mxu0 %v1375
    %2169 = vmatpush1.bf16.msra.mxu0 %v1374
    %2170 = vmatprep.subr.bf16.mxu0 %v1381
    %2171 = vmatpush1.bf16.msra.mxu0 %v1380
    %2172 = vmatprep.subr.bf16.mxu0 %v1387
    %2173 = vmatpush1.bf16.msra.mxu0 %v1386
    %2174 = vmatprep.subr.bf16.mxu0 %v1393
    %2175 = vmatpush1.bf16.msra.mxu0 %v1392
    %2176 = vmatprep.subr.bf16.mxu0 %v1399
    %2177 = vmatpush1.bf16.msra.mxu0 %v1398
    %2178 = vmatprep.subr.bf16.mxu0 %v1405
    %2179 = vmatpush1.bf16.msra.mxu0 %v1404
    %2180 = vmatprep.subr.bf16.mxu0 %v1411
    %2181 = vmatpush1.bf16.msra.mxu0 %v1410
    %2182 = vmatprep.mubr.bf16.mxu0 %v148
    %2183 = vmatmul.mubr.bf16.gmra.mrb[0].mxu0 %v147
    %v2184 = vpop.f32.mrb[0].mxu0
    %v2185 = vadd.f32 0.0, %v2184
    %v2186 = vpop.f32.mrb[0].mxu0
    %v2187 = vadd.f32 0.0, %v2186
    %v2188 = vpop.f32.mrb[0].mxu0
    %v2189 = vadd.f32 0.0, %v2188
    %v2190 = vpop.f32.mrb[0].mxu0
    %v2191 = vadd.f32 0.0, %v2190
    %2192 = vdwg.mxu0
    %2193 = vmatprep.subr.bf16.mxu0 %v1417
    %2194 = vmatpush1.bf16.msra.mxu0 %v1416
    %2195 = vmatprep.subr.bf16.mxu0 %v1423
    %2196 = vmatpush1.bf16.msra.mxu0 %v1422
    %2197 = vmatprep.subr.bf16.mxu0 %v1429
    %2198 = vmatpush1.bf16.msra.mxu0 %v1428
    %2199 = vmatprep.subr.bf16.mxu0 %v1435
    %2200 = vmatpush1.bf16.msra.mxu0 %v1434
    %2201 = vmatprep.subr.bf16.mxu0 %v1441
    %2202 = vmatpush1.bf16.msra.mxu0 %v1440
    %2203 = vmatprep.subr.bf16.mxu0 %v1447
    %2204 = vmatpush1.bf16.msra.mxu0 %v1446
    %2205 = vmatprep.subr.bf16.mxu0 %v1453
    %2206 = vmatpush1.bf16.msra.mxu0 %v1452
    %2207 = vmatprep.subr.bf16.mxu0 %v1459
    %2208 = vmatpush1.bf16.msra.mxu0 %v1458
    %2209 = vmatprep.subr.bf16.mxu0 %v1465
    %2210 = vmatpush1.bf16.msra.mxu0 %v1464
    %2211 = vmatprep.subr.bf16.mxu0 %v1471
    %2212 = vmatpush1.bf16.msra.mxu0 %v1470
    %2213 = vmatprep.subr.bf16.mxu0 %v1477
    %2214 = vmatpush1.bf16.msra.mxu0 %v1476
    %2215 = vmatprep.subr.bf16.mxu0 %v1483
    %2216 = vmatpush1.bf16.msra.mxu0 %v1482
    %2217 = vmatprep.subr.bf16.mxu0 %v1489
    %2218 = vmatpush1.bf16.msra.mxu0 %v1488
    %2219 = vmatprep.subr.bf16.mxu0 %v1495
    %2220 = vmatpush1.bf16.msra.mxu0 %v1494
    %2221 = vmatprep.subr.bf16.mxu0 %v1501
    %2222 = vmatpush1.bf16.msra.mxu0 %v1500
    %2223 = vmatprep.subr.bf16.mxu0 %v1507
    %2224 = vmatpush1.bf16.msra.mxu0 %v1506
    %2225 = vmatprep.mubr.bf16.mxu0 %v150
    %2226 = vmatmul.mubr.bf16.gmra.mrb[0].mxu0 %v149
    %v2227 = vpop.f32.mrb[0].mxu0
    %v2228 = vadd.f32 %v2185, %v2227
    %v2229 = vpop.f32.mrb[0].mxu0
    %v2230 = vadd.f32 %v2187, %v2229
    %v2231 = vpop.f32.mrb[0].mxu0
    %v2232 = vadd.f32 %v2189, %v2231
    %v2233 = vpop.f32.mrb[0].mxu0
    %v2234 = vadd.f32 %v2191, %v2233
    %2235 = vdwg.mxu0
    %2236 = vmatprep.subr.bf16.mxu0 %v1513
    %2237 = vmatpush1.bf16.msra.mxu0 %v1512
    %2238 = vmatprep.subr.bf16.mxu0 %v1519
    %2239 = vmatpush1.bf16.msra.mxu0 %v1518
    %2240 = vmatprep.subr.bf16.mxu0 %v1525
    %2241 = vmatpush1.bf16.msra.mxu0 %v1524
    %2242 = vmatprep.subr.bf16.mxu0 %v1531
    %2243 = vmatpush1.bf16.msra.mxu0 %v1530
    %2244 = vmatprep.subr.bf16.mxu0 %v1537
    %2245 = vmatpush1.bf16.msra.mxu0 %v1536
    %2246 = vmatprep.subr.bf16.mxu0 %v1543
    %2247 = vmatpush1.bf16.msra.mxu0 %v1542
    %2248 = vmatprep.subr.bf16.mxu0 %v1549
    %2249 = vmatpush1.bf16.msra.mxu0 %v1548
    %2250 = vmatprep.subr.bf16.mxu0 %v1555
    %2251 = vmatpush1.bf16.msra.mxu0 %v1554
    %2252 = vmatprep.subr.bf16.mxu0 %v1561
    %2253 = vmatpush1.bf16.msra.mxu0 %v1560
    %2254 = vmatprep.subr.bf16.mxu0 %v1567
    %2255 = vmatpush1.bf16.msra.mxu0 %v1566
    %2256 = vmatprep.subr.bf16.mxu0 %v1573
    %2257 = vmatpush1.bf16.msra.mxu0 %v1572
    %2258 = vmatprep.subr.bf16.mxu0 %v1579
    %2259 = vmatpush1.bf16.msra.mxu0 %v1578
    %2260 = vmatprep.subr.bf16.mxu0 %v1585
    %2261 = vmatpush1.bf16.msra.mxu0 %v1584
    %2262 = vmatprep.subr.bf16.mxu0 %v1591
    %2263 = vmatpush1.bf16.msra.mxu0 %v1590
    %2264 = vmatprep.subr.bf16.mxu0 %v1597
    %2265 = vmatpush1.bf16.msra.mxu0 %v1596
    %2266 = vmatprep.subr.bf16.mxu0 %v1603
    %2267 = vmatpush1.bf16.msra.mxu0 %v1602
    %2268 = vmatprep.mubr.bf16.mxu0 %v152
    %2269 = vmatmul.mubr.bf16.gmra.mrb[0].mxu0 %v151
    %v2270 = vpop.f32.mrb[0].mxu0
    %v2271 = vadd.f32 %v2228, %v2270
    %v2272 = vpop.f32.mrb[0].mxu0
    %v2273 = vadd.f32 %v2230, %v2272
    %v2274 = vpop.f32.mrb[0].mxu0
    %v2275 = vadd.f32 %v2232, %v2274
    %v2276 = vpop.f32.mrb[0].mxu0
    %v2277 = vadd.f32 %v2234, %v2276
    %2278 = vdwg.mxu0
    %v2279 = vld [vmem:[#allocation13] ss:$8 sm:$0xf]
    %v2280 = vld [vmem:[#allocation13] ss:$8 sm:$0x30]
    %v2281 = vor.u32 %v2279, %v2280
    %s2282 = scalar_lea.vmem [#allocation13], 1
    %v2283 = vld [vmem:[%s2282] ss:$8 sm:$0xf]
    %v2284 = vld [vmem:[%s2282] ss:$8 sm:$0x30]
    %v2285 = vor.u32 %v2283, %v2284
    %v2286 = vmul.f32 %v2013, %v135
    %v2287 = vmul.f32 %v2015, %v136
    %v2288 = vmul.f32 %v2142, %v137
    %v2289 = vmul.f32 %v2144, %v138
    %v2290 = vmul.f32 %v2271, %v139
    %v2291 = vmul.f32 %v2273, %v140
    %v2292 = vmul.f32 %v2017, %v141
    %v2293 = vmul.f32 %v2019, %v142
    %v2294 = vmul.f32 %v2146, %v143
    %v2295 = vmul.f32 %v2148, %v144
    %v2296 = vmul.f32 %v2275, %v145
    %v2297 = vmul.f32 %v2277, %v146
    %v2298 = vstv %s159
    %v2299 = vmul.f32 %v2298, %v2286
    %v2300 = vmul.f32 %v2298, %v2287
    %v2301 = vmul.f32 %v2298, %v2288
    %v2302 = vmul.f32 %v2298, %v2289
    %v2303 = vmul.f32 %v2298, %v2290
    %v2304 = vmul.f32 %v2298, %v2291
    %v2305 = vmul.f32 %v2298, %v2292
    %v2306 = vmul.f32 %v2298, %v2293
    %v2307 = vmul.f32 %v2298, %v2294
    %v2308 = vmul.f32 %v2298, %v2295
    %v2309 = vmul.f32 %v2298, %v2296
    %v2310 = vmul.f32 %v2298, %v2297
    %v2311 = vmul.f32 %v123, %v123
    %v2312 = vmul.f32 %v124, %v124
    %v2313 = vmul.f32 %v125, %v125
    %v2314 = vmul.f32 %v126, %v126
    %v2315 = vmul.f32 %v127, %v127
    %v2316 = vmul.f32 %v128, %v128
    %v2317 = vmul.f32 %v129, %v129
    %v2318 = vmul.f32 %v130, %v130
    %v2319 = vmul.f32 %v131, %v131
    %v2320 = vmul.f32 %v132, %v132
    %v2321 = vmul.f32 %v133, %v133
    %v2322 = vmul.f32 %v134, %v134
    %v2324 = vlaneseq
    %v2325 = vshrl.u32 %v2324, 7
    %v2326 = vsub.s32 0, %v2325
    %v2327 = vrot.slane %v2281, %v2326
    %v2328 = vlaneseq
    %v2329 = vshrl.u32 %v2328, 7
    %v2330 = vsub.s32 1, %v2329
    %v2331 = vrot.slane %v2281, %v2330
    %v2332 = vlaneseq
    %v2333 = vshrl.u32 %v2332, 7
    %v2334 = vsub.s32 2, %v2333
    %v2335 = vrot.slane %v2281, %v2334
    %v2336 = vlaneseq
    %v2337 = vshrl.u32 %v2336, 7
    %v2338 = vsub.s32 3, %v2337
    %v2339 = vrot.slane %v2281, %v2338
    %v2340 = vlaneseq
    %v2341 = vshrl.u32 %v2340, 7
    %v2342 = vsub.s32 4, %v2341
    %v2343 = vrot.slane %v2281, %v2342
    %v2344 = vlaneseq
    %v2345 = vshrl.u32 %v2344, 7
    %v2346 = vsub.s32 5, %v2345
    %v2347 = vrot.slane %v2281, %v2346
    %v2354 = vmul.f32 %v2311, %v2327
    %v2355 = vmul.f32 %v2312, %v2331
    %v2356 = vmul.f32 %v2313, %v2335
    %v2357 = vmul.f32 %v2314, %v2339
    %v2358 = vmul.f32 %v2315, %v2343
    %v2359 = vmul.f32 %v2316, %v2347
    %v2360 = vmul.f32 %v2317, %v2327
    %v2361 = vmul.f32 %v2318, %v2331
    %v2362 = vmul.f32 %v2319, %v2335
    %v2363 = vmul.f32 %v2320, %v2339
    %v2364 = vmul.f32 %v2321, %v2343
    %v2365 = vmul.f32 %v2322, %v2347
    %v2366 = vmul.f32 %v135, %v135
    %v2367 = vmul.f32 %v136, %v136
    %v2368 = vmul.f32 %v137, %v137
    %v2369 = vmul.f32 %v138, %v138
    %v2370 = vmul.f32 %v139, %v139
    %v2371 = vmul.f32 %v140, %v140
    %v2372 = vmul.f32 %v141, %v141
    %v2373 = vmul.f32 %v142, %v142
    %v2374 = vmul.f32 %v143, %v143
    %v2375 = vmul.f32 %v144, %v144
    %v2376 = vmul.f32 %v145, %v145
    %v2377 = vmul.f32 %v146, %v146
    %v2379 = vlaneseq
    %v2380 = vshrl.u32 %v2379, 7
    %v2381 = vsub.s32 0, %v2380
    %v2382 = vrot.slane %v2285, %v2381
    %v2383 = vlaneseq
    %v2384 = vshrl.u32 %v2383, 7
    %v2385 = vsub.s32 1, %v2384
    %v2386 = vrot.slane %v2285, %v2385
    %v2387 = vlaneseq
    %v2388 = vshrl.u32 %v2387, 7
    %v2389 = vsub.s32 2, %v2388
    %v2390 = vrot.slane %v2285, %v2389
    %v2391 = vlaneseq
    %v2392 = vshrl.u32 %v2391, 7
    %v2393 = vsub.s32 3, %v2392
    %v2394 = vrot.slane %v2285, %v2393
    %v2395 = vlaneseq
    %v2396 = vshrl.u32 %v2395, 7
    %v2397 = vsub.s32 4, %v2396
    %v2398 = vrot.slane %v2285, %v2397
    %v2399 = vlaneseq
    %v2400 = vshrl.u32 %v2399, 7
    %v2401 = vsub.s32 5, %v2400
    %v2402 = vrot.slane %v2285, %v2401
    %v2409 = vmul.f32 %v2366, %v2382
    %v2410 = vmul.f32 %v2367, %v2386
    %v2411 = vmul.f32 %v2368, %v2390
    %v2412 = vmul.f32 %v2369, %v2394
    %v2413 = vmul.f32 %v2370, %v2398
    %v2414 = vmul.f32 %v2371, %v2402
    %v2415 = vmul.f32 %v2372, %v2382
    %v2416 = vmul.f32 %v2373, %v2386
    %v2417 = vmul.f32 %v2374, %v2390
    %v2418 = vmul.f32 %v2375, %v2394
    %v2419 = vmul.f32 %v2376, %v2398
    %v2420 = vmul.f32 %v2377, %v2402
    %v2421 = vadd.f32 %v2354, %v2409
    %v2422 = vadd.f32 %v2355, %v2410
    %v2423 = vadd.f32 %v2356, %v2411
    %v2424 = vadd.f32 %v2357, %v2412
    %v2425 = vadd.f32 %v2358, %v2413
    %v2426 = vadd.f32 %v2359, %v2414
    %v2427 = vadd.f32 %v2360, %v2415
    %v2428 = vadd.f32 %v2361, %v2416
    %v2429 = vadd.f32 %v2362, %v2417
    %v2430 = vadd.f32 %v2363, %v2418
    %v2431 = vadd.f32 %v2364, %v2419
    %v2432 = vadd.f32 %v2365, %v2420
    %v2433 = vstv %s163
    %v2434 = vmul.f32 %v2433, %v2421
    %v2435 = vmul.f32 %v2433, %v2422
    %v2436 = vmul.f32 %v2433, %v2423
    %v2437 = vmul.f32 %v2433, %v2424
    %v2438 = vmul.f32 %v2433, %v2425
    %v2439 = vmul.f32 %v2433, %v2426
    %v2440 = vmul.f32 %v2433, %v2427
    %v2441 = vmul.f32 %v2433, %v2428
    %v2442 = vmul.f32 %v2433, %v2429
    %v2443 = vmul.f32 %v2433, %v2430
    %v2444 = vmul.f32 %v2433, %v2431
    %v2445 = vmul.f32 %v2433, %v2432
    %v2446 = vsub.f32 %v2299, %v2434
    %v2447 = vsub.f32 %v2300, %v2435
    %v2448 = vsub.f32 %v2301, %v2436
    %v2449 = vsub.f32 %v2302, %v2437
    %v2450 = vsub.f32 %v2303, %v2438
    %v2451 = vsub.f32 %v2304, %v2439
    %v2452 = vsub.f32 %v2305, %v2440
    %v2453 = vsub.f32 %v2306, %v2441
    %v2454 = vsub.f32 %v2307, %v2442
    %v2455 = vsub.f32 %v2308, %v2443
    %v2456 = vsub.f32 %v2309, %v2444
    %v2457 = vsub.f32 %v2310, %v2445
    %v2458 = vadd.f32 %v2446, %v2447
    %v2459 = vadd.f32 %v2458, %v2448
    %v2460 = vadd.f32 %v2459, %v2449
    %v2461 = vadd.f32 %v2460, %v2450
    %v2462 = vadd.f32 %v2461, %v2451
    %2463 = vadd.xlane.f32.xlu0 %v2462
    %v2464 = vpop.xlane.xlu0 %2463
    %v2465 = vadd.f32 %v2452, %v2453
    %v2466 = vadd.f32 %v2465, %v2454
    %v2467 = vadd.f32 %v2466, %v2455
    %v2468 = vadd.f32 %v2467, %v2456
    %v2469 = vadd.f32 %v2468, %v2457
    %2470 = vadd.xlane.f32.xlu0 %v2469
    %v2471 = vpop.xlane.xlu0 %2470
    %v2472 = vld [vmem:[#allocation10] sm:$0xf]
    %v2473 = vld [vmem:[#allocation10 + $0x4] sm:$0xf]
    %v2474 = vld [vmem:[#allocation10 + $0x8] sm:$0xf]
    %v2475 = vld [vmem:[#allocation10 + $0xc] sm:$0xf]
    %v2476 = vld [vmem:[#allocation10 + $0x10] sm:$0xf]
    %v2477 = vld [vmem:[#allocation10 + $0x14] sm:$0xf]
    %v2478 = vld [vmem:[#allocation10 + $0x18] sm:$0xf]
    %v2479 = vld [vmem:[#allocation10 + $0x1c] sm:$0xf]
    %v2480 = vld [vmem:[#allocation10 + $0x20] sm:$0xf]
    %v2481 = vld [vmem:[#allocation10 + $0x24] sm:$0xf]
    %v2482 = vld [vmem:[#allocation10 + $0x28] sm:$0xf]
    %v2483 = vld [vmem:[#allocation10 + $0x2c] sm:$0xf]
    %v2484 = vld [vmem:[#allocation10 + $0x30] sm:$0xf]
    %v2485 = vld [vmem:[#allocation10 + $0x34] sm:$0xf]
    %v2486 = vld [vmem:[#allocation10 + $0x38] sm:$0xf]
    %v2487 = vld [vmem:[#allocation10 + $0x3c] sm:$0xf]
    %v2488 = vld [vmem:[#allocation10 + $0x40] sm:$0xf]
    %v2489 = vld [vmem:[#allocation10 + $0x44] sm:$0xf]
    %v2490 = vld [vmem:[#allocation10 + $0x48] sm:$0xf]
    %v2491 = vld [vmem:[#allocation10 + $0x4c] sm:$0xf]
    %v2492 = vld [vmem:[#allocation10 + $0x50] sm:$0xf]
    %v2493 = vld [vmem:[#allocation10 + $0x54] sm:$0xf]
    %v2494 = vld [vmem:[#allocation10 + $0x58] sm:$0xf]
    %v2495 = vld [vmem:[#allocation10 + $0x5c] sm:$0xf]
    %v2496 = vld [vmem:[#allocation10 + $0x60] sm:$0xf]
    %v2497 = vld [vmem:[#allocation10 + $0x64] sm:$0xf]
    %v2498 = vld [vmem:[#allocation10 + $0x68] sm:$0xf]
    %v2499 = vld [vmem:[#allocation10 + $0x6c] sm:$0xf]
    %v2500 = vld [vmem:[#allocation10 + $0x70] sm:$0xf]
    %v2501 = vld [vmem:[#allocation10 + $0x74] sm:$0xf]
    %v2502 = vld [vmem:[#allocation10 + $0x78] sm:$0xf]
    %v2503 = vld [vmem:[#allocation10 + $0x7c] sm:$0xf]
    %v2504 = vld [vmem:[#allocation10 + $0x80] sm:$0xf]
    %v2505 = vld [vmem:[#allocation10 + $0x84] sm:$0xf]
    %v2506 = vld [vmem:[#allocation10 + $0x88] sm:$0xf]
    %v2507 = vld [vmem:[#allocation10 + $0x8c] sm:$0xf]
    %v2508 = vld [vmem:[#allocation10 + $0x90] sm:$0xf]
    %v2509 = vld [vmem:[#allocation10 + $0x94] sm:$0xf]
    %v2510 = vld [vmem:[#allocation10 + $0x98] sm:$0xf]
    %v2511 = vld [vmem:[#allocation10 + $0x9c] sm:$0xf]
    %v2512 = vld [vmem:[#allocation10 + $0xa0] sm:$0xf]
    %v2513 = vld [vmem:[#allocation10 + $0xa4] sm:$0xf]
    %v2514 = vld [vmem:[#allocation10 + $0xa8] sm:$0xf]
    %v2515 = vld [vmem:[#allocation10 + $0xac] sm:$0xf]
    %v2516 = vld [vmem:[#allocation10 + $0xb0] sm:$0xf]
    %v2517 = vld [vmem:[#allocation10 + $0xb4] sm:$0xf]
    %v2518 = vld [vmem:[#allocation10 + $0xb8] sm:$0xf]
    %v2519 = vld [vmem:[#allocation10 + $0xbc] sm:$0xf]
    %v2520 = vld [vmem:[#allocation10 + $0xc0] sm:$0xf]
    %v2521 = vld [vmem:[#allocation10 + $0xc4] sm:$0xf]
    %v2522 = vld [vmem:[#allocation10 + $0xc8] sm:$0xf]
    %v2523 = vld [vmem:[#allocation10 + $0xcc] sm:$0xf]
    %v2524 = vld [vmem:[#allocation10 + $0xd0] sm:$0xf]
    %v2525 = vld [vmem:[#allocation10 + $0xd4] sm:$0xf]
    %v2526 = vld [vmem:[#allocation10 + $0xd8] sm:$0xf]
    %v2527 = vld [vmem:[#allocation10 + $0xdc] sm:$0xf]
    %v2528 = vld [vmem:[#allocation10 + $0xe0] sm:$0xf]
    %v2529 = vld [vmem:[#allocation10 + $0xe4] sm:$0xf]
    %v2530 = vld [vmem:[#allocation10 + $0xe8] sm:$0xf]
    %v2531 = vld [vmem:[#allocation10 + $0xec] sm:$0xf]
    %v2532 = vld [vmem:[#allocation10 + $0xf0] sm:$0xf]
    %v2533 = vld [vmem:[#allocation10 + $0xf4] sm:$0xf]
    %v2534 = vld [vmem:[#allocation10 + $0xf8] sm:$0xf]
    %v2535 = vld [vmem:[#allocation10 + $0xfc] sm:$0xf]
    %v2536 = vld [vmem:[#allocation10 + $0x100] sm:$0xf]
    %v2537 = vld [vmem:[#allocation10 + $0x104] sm:$0xf]
    %v2538 = vld [vmem:[#allocation10 + $0x108] sm:$0xf]
    %v2539 = vld [vmem:[#allocation10 + $0x10c] sm:$0xf]
    %v2540 = vld [vmem:[#allocation10 + $0x110] sm:$0xf]
    %v2541 = vld [vmem:[#allocation10 + $0x114] sm:$0xf]
    %v2542 = vld [vmem:[#allocation10 + $0x118] sm:$0xf]
    %v2543 = vld [vmem:[#allocation10 + $0x11c] sm:$0xf]
    %v2544 = vld [vmem:[#allocation10 + $0x120] sm:$0xf]
    %v2545 = vld [vmem:[#allocation10 + $0x124] sm:$0xf]
    %v2546 = vld [vmem:[#allocation10 + $0x128] sm:$0xf]
    %v2547 = vld [vmem:[#allocation10 + $0x12c] sm:$0xf]
    %v2548 = vld [vmem:[#allocation10 + $0x130] sm:$0xf]
    %v2549 = vld [vmem:[#allocation10 + $0x134] sm:$0xf]
    %v2550 = vld [vmem:[#allocation10 + $0x138] sm:$0xf]
    %v2551 = vld [vmem:[#allocation10 + $0x13c] sm:$0xf]
    %v2552 = vld [vmem:[#allocation10 + $0x140] sm:$0xf]
    %v2553 = vld [vmem:[#allocation10 + $0x144] sm:$0xf]
    %v2554 = vld [vmem:[#allocation10 + $0x148] sm:$0xf]
    %v2555 = vld [vmem:[#allocation10 + $0x14c] sm:$0xf]
    %v2556 = vld [vmem:[#allocation10 + $0x150] sm:$0xf]
    %v2557 = vld [vmem:[#allocation10 + $0x154] sm:$0xf]
    %v2558 = vld [vmem:[#allocation10 + $0x158] sm:$0xf]
    %v2559 = vld [vmem:[#allocation10 + $0x15c] sm:$0xf]
    %v2560 = vld [vmem:[#allocation10 + $0x160] sm:$0xf]
    %v2561 = vld [vmem:[#allocation10 + $0x164] sm:$0xf]
    %v2562 = vld [vmem:[#allocation10 + $0x168] sm:$0xf]
    %v2563 = vld [vmem:[#allocation10 + $0x16c] sm:$0xf]
    %v2564 = vld [vmem:[#allocation10 + $0x170] sm:$0xf]
    %v2565 = vld [vmem:[#allocation10 + $0x174] sm:$0xf]
    %v2566 = vld [vmem:[#allocation10 + $0x178] sm:$0xf]
    %v2567 = vld [vmem:[#allocation10 + $0x17c] sm:$0xf]
    %v2568 = vld [vmem:[#allocation12] sm:$0xf]
    %v2569 = vld [vmem:[#allocation12 + $0x4] sm:$0xf]
    %v2570 = vld [vmem:[#allocation12 + $0x8] sm:$0xf]
    %v2571 = vld [vmem:[#allocation12 + $0xc] sm:$0xf]
    %v2572 = vld [vmem:[#allocation12 + $0x10] sm:$0xf]
    %v2573 = vld [vmem:[#allocation12 + $0x14] sm:$0xf]
    %v2574 = vld [vmem:[#allocation12 + $0x18] sm:$0xf]
    %v2575 = vld [vmem:[#allocation12 + $0x1c] sm:$0xf]
    %v2576 = vld [vmem:[#allocation12 + $0x20] sm:$0xf]
    %v2577 = vld [vmem:[#allocation12 + $0x24] sm:$0xf]
    %v2578 = vld [vmem:[#allocation12 + $0x28] sm:$0xf]
    %v2579 = vld [vmem:[#allocation12 + $0x2c] sm:$0xf]
    %v2580 = vld [vmem:[#allocation12 + $0x30] sm:$0xf]
    %v2581 = vld [vmem:[#allocation12 + $0x34] sm:$0xf]
    %v2582 = vld [vmem:[#allocation12 + $0x38] sm:$0xf]
    %v2583 = vld [vmem:[#allocation12 + $0x3c] sm:$0xf]
    %v2584 = vld [vmem:[#allocation12 + $0x40] sm:$0xf]
    %v2585 = vld [vmem:[#allocation12 + $0x44] sm:$0xf]
    %v2586 = vld [vmem:[#allocation12 + $0x48] sm:$0xf]
    %v2587 = vld [vmem:[#allocation12 + $0x4c] sm:$0xf]
    %v2588 = vld [vmem:[#allocation12 + $0x50] sm:$0xf]
    %v2589 = vld [vmem:[#allocation12 + $0x54] sm:$0xf]
    %v2590 = vld [vmem:[#allocation12 + $0x58] sm:$0xf]
    %v2591 = vld [vmem:[#allocation12 + $0x5c] sm:$0xf]
    %v2592 = vld [vmem:[#allocation12 + $0x60] sm:$0xf]
    %v2593 = vld [vmem:[#allocation12 + $0x64] sm:$0xf]
    %v2594 = vld [vmem:[#allocation12 + $0x68] sm:$0xf]
    %v2595 = vld [vmem:[#allocation12 + $0x6c] sm:$0xf]
    %v2596 = vld [vmem:[#allocation12 + $0x70] sm:$0xf]
    %v2597 = vld [vmem:[#allocation12 + $0x74] sm:$0xf]
    %v2598 = vld [vmem:[#allocation12 + $0x78] sm:$0xf]
    %v2599 = vld [vmem:[#allocation12 + $0x7c] sm:$0xf]
    %v2600 = vld [vmem:[#allocation12 + $0x80] sm:$0xf]
    %v2601 = vld [vmem:[#allocation12 + $0x84] sm:$0xf]
    %v2602 = vld [vmem:[#allocation12 + $0x88] sm:$0xf]
    %v2603 = vld [vmem:[#allocation12 + $0x8c] sm:$0xf]
    %v2604 = vld [vmem:[#allocation12 + $0x90] sm:$0xf]
    %v2605 = vld [vmem:[#allocation12 + $0x94] sm:$0xf]
    %v2606 = vld [vmem:[#allocation12 + $0x98] sm:$0xf]
    %v2607 = vld [vmem:[#allocation12 + $0x9c] sm:$0xf]
    %v2608 = vld [vmem:[#allocation12 + $0xa0] sm:$0xf]
    %v2609 = vld [vmem:[#allocation12 + $0xa4] sm:$0xf]
    %v2610 = vld [vmem:[#allocation12 + $0xa8] sm:$0xf]
    %v2611 = vld [vmem:[#allocation12 + $0xac] sm:$0xf]
    %v2612 = vld [vmem:[#allocation12 + $0xb0] sm:$0xf]
    %v2613 = vld [vmem:[#allocation12 + $0xb4] sm:$0xf]
    %v2614 = vld [vmem:[#allocation12 + $0xb8] sm:$0xf]
    %v2615 = vld [vmem:[#allocation12 + $0xbc] sm:$0xf]
    %v2616 = vld [vmem:[#allocation12 + $0xc0] sm:$0xf]
    %v2617 = vld [vmem:[#allocation12 + $0xc4] sm:$0xf]
    %v2618 = vld [vmem:[#allocation12 + $0xc8] sm:$0xf]
    %v2619 = vld [vmem:[#allocation12 + $0xcc] sm:$0xf]
    %v2620 = vld [vmem:[#allocation12 + $0xd0] sm:$0xf]
    %v2621 = vld [vmem:[#allocation12 + $0xd4] sm:$0xf]
    %v2622 = vld [vmem:[#allocation12 + $0xd8] sm:$0xf]
    %v2623 = vld [vmem:[#allocation12 + $0xdc] sm:$0xf]
    %v2624 = vld [vmem:[#allocation12 + $0xe0] sm:$0xf]
    %v2625 = vld [vmem:[#allocation12 + $0xe4] sm:$0xf]
    %v2626 = vld [vmem:[#allocation12 + $0xe8] sm:$0xf]
    %v2627 = vld [vmem:[#allocation12 + $0xec] sm:$0xf]
    %v2628 = vld [vmem:[#allocation12 + $0xf0] sm:$0xf]
    %v2629 = vld [vmem:[#allocation12 + $0xf4] sm:$0xf]
    %v2630 = vld [vmem:[#allocation12 + $0xf8] sm:$0xf]
    %v2631 = vld [vmem:[#allocation12 + $0xfc] sm:$0xf]
    %v2632 = vld [vmem:[#allocation12 + $0x100] sm:$0xf]
    %v2633 = vld [vmem:[#allocation12 + $0x104] sm:$0xf]
    %v2634 = vld [vmem:[#allocation12 + $0x108] sm:$0xf]
    %v2635 = vld [vmem:[#allocation12 + $0x10c] sm:$0xf]
    %v2636 = vld [vmem:[#allocation12 + $0x110] sm:$0xf]
    %v2637 = vld [vmem:[#allocation12 + $0x114] sm:$0xf]
    %v2638 = vld [vmem:[#allocation12 + $0x118] sm:$0xf]
    %v2639 = vld [vmem:[#allocation12 + $0x11c] sm:$0xf]
    %v2640 = vld [vmem:[#allocation12 + $0x120] sm:$0xf]
    %v2641 = vld [vmem:[#allocation12 + $0x124] sm:$0xf]
    %v2642 = vld [vmem:[#allocation12 + $0x128] sm:$0xf]
    %v2643 = vld [vmem:[#allocation12 + $0x12c] sm:$0xf]
    %v2644 = vld [vmem:[#allocation12 + $0x130] sm:$0xf]
    %v2645 = vld [vmem:[#allocation12 + $0x134] sm:$0xf]
    %v2646 = vld [vmem:[#allocation12 + $0x138] sm:$0xf]
    %v2647 = vld [vmem:[#allocation12 + $0x13c] sm:$0xf]
    %v2648 = vld [vmem:[#allocation12 + $0x140] sm:$0xf]
    %v2649 = vld [vmem:[#allocation12 + $0x144] sm:$0xf]
    %v2650 = vld [vmem:[#allocation12 + $0x148] sm:$0xf]
    %v2651 = vld [vmem:[#allocation12 + $0x14c] sm:$0xf]
    %v2652 = vld [vmem:[#allocation12 + $0x150] sm:$0xf]
    %v2653 = vld [vmem:[#allocation12 + $0x154] sm:$0xf]
    %v2654 = vld [vmem:[#allocation12 + $0x158] sm:$0xf]
    %v2655 = vld [vmem:[#allocation12 + $0x15c] sm:$0xf]
    %v2656 = vld [vmem:[#allocation12 + $0x160] sm:$0xf]
    %v2657 = vld [vmem:[#allocation12 + $0x164] sm:$0xf]
    %v2658 = vld [vmem:[#allocation12 + $0x168] sm:$0xf]
    %v2659 = vld [vmem:[#allocation12 + $0x16c] sm:$0xf]
    %v2660 = vld [vmem:[#allocation12 + $0x170] sm:$0xf]
    %v2661 = vld [vmem:[#allocation12 + $0x174] sm:$0xf]
    %v2662 = vld [vmem:[#allocation12 + $0x178] sm:$0xf]
    %v2663 = vld [vmem:[#allocation12 + $0x17c] sm:$0xf]
    %v2760 = vunpack.c.l.b16 %v2568
    %v2761 = vunpack.c.l.b16 %v2569
    %v2762 = vunpack.c.l.b16 %v2570
    %v2763 = vunpack.c.l.b16 %v2571
    %v2764 = vunpack.c.l.b16 %v2572
    %v2765 = vunpack.c.l.b16 %v2573
    %v2766 = vunpack.c.l.b16 %v2574
    %v2767 = vunpack.c.l.b16 %v2575
    %v2768 = vunpack.c.l.b16 %v2576
    %v2769 = vunpack.c.l.b16 %v2577
    %v2770 = vunpack.c.l.b16 %v2578
    %v2771 = vunpack.c.l.b16 %v2579
    %v2772 = vunpack.c.l.b16 %v2580
    %v2773 = vunpack.c.l.b16 %v2581
    %v2774 = vunpack.c.l.b16 %v2582
    %v2775 = vunpack.c.l.b16 %v2583
    %v2776 = vunpack.c.l.b16 %v2584
    %v2777 = vunpack.c.l.b16 %v2585
    %v2778 = vunpack.c.l.b16 %v2586
    %v2779 = vunpack.c.l.b16 %v2587
    %v2780 = vunpack.c.l.b16 %v2588
    %v2781 = vunpack.c.l.b16 %v2589
    %v2782 = vunpack.c.l.b16 %v2590
    %v2783 = vunpack.c.l.b16 %v2591
    %v2784 = vunpack.c.l.b16 %v2592
    %v2785 = vunpack.c.l.b16 %v2593
    %v2786 = vunpack.c.l.b16 %v2594
    %v2787 = vunpack.c.l.b16 %v2595
    %v2788 = vunpack.c.l.b16 %v2596
    %v2789 = vunpack.c.l.b16 %v2597
    %v2790 = vunpack.c.l.b16 %v2598
    %v2791 = vunpack.c.l.b16 %v2599
    %v2792 = vunpack.c.l.b16 %v2600
    %v2793 = vunpack.c.l.b16 %v2601
    %v2794 = vunpack.c.l.b16 %v2602
    %v2795 = vunpack.c.l.b16 %v2603
    %v2796 = vunpack.c.l.b16 %v2604
    %v2797 = vunpack.c.l.b16 %v2605
    %v2798 = vunpack.c.l.b16 %v2606
    %v2799 = vunpack.c.l.b16 %v2607
    %v2800 = vunpack.c.l.b16 %v2608
    %v2801 = vunpack.c.l.b16 %v2609
    %v2802 = vunpack.c.l.b16 %v2610
    %v2803 = vunpack.c.l.b16 %v2611
    %v2804 = vunpack.c.l.b16 %v2612
    %v2805 = vunpack.c.l.b16 %v2613
    %v2806 = vunpack.c.l.b16 %v2614
    %v2807 = vunpack.c.l.b16 %v2615
    %v2808 = vunpack.c.l.b16 %v2616
    %v2809 = vunpack.c.l.b16 %v2617
    %v2810 = vunpack.c.l.b16 %v2618
    %v2811 = vunpack.c.l.b16 %v2619
    %v2812 = vunpack.c.l.b16 %v2620
    %v2813 = vunpack.c.l.b16 %v2621
    %v2814 = vunpack.c.l.b16 %v2622
    %v2815 = vunpack.c.l.b16 %v2623
    %v2816 = vunpack.c.l.b16 %v2624
    %v2817 = vunpack.c.l.b16 %v2625
    %v2818 = vunpack.c.l.b16 %v2626
    %v2819 = vunpack.c.l.b16 %v2627
    %v2820 = vunpack.c.l.b16 %v2628
    %v2821 = vunpack.c.l.b16 %v2629
    %v2822 = vunpack.c.l.b16 %v2630
    %v2823 = vunpack.c.l.b16 %v2631
    %v2824 = vunpack.c.l.b16 %v2632
    %v2825 = vunpack.c.l.b16 %v2633
    %v2826 = vunpack.c.l.b16 %v2634
    %v2827 = vunpack.c.l.b16 %v2635
    %v2828 = vunpack.c.l.b16 %v2636
    %v2829 = vunpack.c.l.b16 %v2637
    %v2830 = vunpack.c.l.b16 %v2638
    %v2831 = vunpack.c.l.b16 %v2639
    %v2832 = vunpack.c.l.b16 %v2640
    %v2833 = vunpack.c.l.b16 %v2641
    %v2834 = vunpack.c.l.b16 %v2642
    %v2835 = vunpack.c.l.b16 %v2643
    %v2836 = vunpack.c.l.b16 %v2644
    %v2837 = vunpack.c.l.b16 %v2645
    %v2838 = vunpack.c.l.b16 %v2646
    %v2839 = vunpack.c.l.b16 %v2647
    %v2840 = vunpack.c.l.b16 %v2648
    %v2841 = vunpack.c.l.b16 %v2649
    %v2842 = vunpack.c.l.b16 %v2650
    %v2843 = vunpack.c.l.b16 %v2651
    %v2844 = vunpack.c.l.b16 %v2652
    %v2845 = vunpack.c.l.b16 %v2653
    %v2846 = vunpack.c.l.b16 %v2654
    %v2847 = vunpack.c.l.b16 %v2655
    %v2848 = vunpack.c.l.b16 %v2656
    %v2849 = vunpack.c.l.b16 %v2657
    %v2850 = vunpack.c.l.b16 %v2658
    %v2851 = vunpack.c.l.b16 %v2659
    %v2852 = vunpack.c.l.b16 %v2660
    %v2853 = vunpack.c.l.b16 %v2661
    %v2854 = vunpack.c.l.b16 %v2662
    %v2855 = vunpack.c.l.b16 %v2663
    %v2856 = vpack.c.b16 %v2761, %v2760
    %v2857 = vpack.c.b16 %v2763, %v2762
    %v2858 = vpack.c.b16 %v2765, %v2764
    %v2859 = vpack.c.b16 %v2767, %v2766
    %v2860 = vpack.c.b16 %v2769, %v2768
    %v2861 = vpack.c.b16 %v2771, %v2770
    %v2862 = vpack.c.b16 %v2773, %v2772
    %v2863 = vpack.c.b16 %v2775, %v2774
    %v2864 = vpack.c.b16 %v2777, %v2776
    %v2865 = vpack.c.b16 %v2779, %v2778
    %v2866 = vpack.c.b16 %v2781, %v2780
    %v2867 = vpack.c.b16 %v2783, %v2782
    %v2868 = vpack.c.b16 %v2785, %v2784
    %v2869 = vpack.c.b16 %v2787, %v2786
    %v2870 = vpack.c.b16 %v2789, %v2788
    %v2871 = vpack.c.b16 %v2791, %v2790
    %v2872 = vpack.c.b16 %v2793, %v2792
    %v2873 = vpack.c.b16 %v2795, %v2794
    %v2874 = vpack.c.b16 %v2797, %v2796
    %v2875 = vpack.c.b16 %v2799, %v2798
    %v2876 = vpack.c.b16 %v2801, %v2800
    %v2877 = vpack.c.b16 %v2803, %v2802
    %v2878 = vpack.c.b16 %v2805, %v2804
    %v2879 = vpack.c.b16 %v2807, %v2806
    %v2880 = vpack.c.b16 %v2809, %v2808
    %v2881 = vpack.c.b16 %v2811, %v2810
    %v2882 = vpack.c.b16 %v2813, %v2812
    %v2883 = vpack.c.b16 %v2815, %v2814
    %v2884 = vpack.c.b16 %v2817, %v2816
    %v2885 = vpack.c.b16 %v2819, %v2818
    %v2886 = vpack.c.b16 %v2821, %v2820
    %v2887 = vpack.c.b16 %v2823, %v2822
    %v2888 = vpack.c.b16 %v2825, %v2824
    %v2889 = vpack.c.b16 %v2827, %v2826
    %v2890 = vpack.c.b16 %v2829, %v2828
    %v2891 = vpack.c.b16 %v2831, %v2830
    %v2892 = vpack.c.b16 %v2833, %v2832
    %v2893 = vpack.c.b16 %v2835, %v2834
    %v2894 = vpack.c.b16 %v2837, %v2836
    %v2895 = vpack.c.b16 %v2839, %v2838
    %v2896 = vpack.c.b16 %v2841, %v2840
    %v2897 = vpack.c.b16 %v2843, %v2842
    %v2898 = vpack.c.b16 %v2845, %v2844
    %v2899 = vpack.c.b16 %v2847, %v2846
    %v2900 = vpack.c.b16 %v2849, %v2848
    %v2901 = vpack.c.b16 %v2851, %v2850
    %v2902 = vpack.c.b16 %v2853, %v2852
    %v2903 = vpack.c.b16 %v2855, %v2854
    %2952 = vmatprep.subr.bf16.mxu0 0
    %2953 = vmatpush1.bf16.msra.mxu0 %v2856
    %2954 = vmatprep.subr.bf16.mxu0 0
    %2955 = vmatpush1.bf16.msra.mxu0 %v2857
    %2956 = vmatprep.subr.bf16.mxu0 0
    %2957 = vmatpush1.bf16.msra.mxu0 %v2858
    %2958 = vmatprep.subr.bf16.mxu0 0
    %2959 = vmatpush1.bf16.msra.mxu0 %v2859
    %2960 = vmatprep.subr.bf16.mxu0 0
    %2961 = vmatpush1.bf16.msra.mxu0 %v2860
    %2962 = vmatprep.subr.bf16.mxu0 0
    %2963 = vmatpush1.bf16.msra.mxu0 %v2861
    %2964 = vmatprep.subr.bf16.mxu0 0
    %2965 = vmatpush1.bf16.msra.mxu0 %v2862
    %2966 = vmatprep.subr.bf16.mxu0 0
    %2967 = vmatpush1.bf16.msra.mxu0 %v2863
    %2968 = vmatprep.subr.bf16.mxu0 0
    %2969 = vmatpush1.bf16.msra.mxu0 %v2864
    %2970 = vmatprep.subr.bf16.mxu0 0
    %2971 = vmatpush1.bf16.msra.mxu0 %v2865
    %2972 = vmatprep.subr.bf16.mxu0 0
    %2973 = vmatpush1.bf16.msra.mxu0 %v2866
    %2974 = vmatprep.subr.bf16.mxu0 0
    %2975 = vmatpush1.bf16.msra.mxu0 %v2867
    %2976 = vmatprep.subr.bf16.mxu0 0
    %2977 = vmatpush1.bf16.msra.mxu0 %v2868
    %2978 = vmatprep.subr.bf16.mxu0 0
    %2979 = vmatpush1.bf16.msra.mxu0 %v2869
    %2980 = vmatprep.subr.bf16.mxu0 0
    %2981 = vmatpush1.bf16.msra.mxu0 %v2870
    %2982 = vmatprep.subr.bf16.mxu0 0
    %2983 = vmatpush1.bf16.msra.mxu0 %v2871
    %2984 = vmatprep.mubr.bf16.mxu0 %v154
    %2985 = vmatmul.mubr.bf16.gmra.mrb[0].mxu0 %v153
    %v2986 = vpop.f32.mrb[0].mxu0
    %v2987 = vadd.f32 0.0, %v2986
    %v2988 = vpop.f32.mrb[0].mxu0
    %v2989 = vpop.f32.mrb[0].mxu0
    %v2990 = vadd.f32 0.0, %v2989
    %v2991 = vpop.f32.mrb[0].mxu0
    %2992 = vdwg.mxu0
    %2993 = vmatprep.subr.bf16.mxu0 0
    %2994 = vmatpush1.bf16.msra.mxu0 %v2872
    %2995 = vmatprep.subr.bf16.mxu0 0
    %2996 = vmatpush1.bf16.msra.mxu0 %v2873
    %2997 = vmatprep.subr.bf16.mxu0 0
    %2998 = vmatpush1.bf16.msra.mxu0 %v2874
    %2999 = vmatprep.subr.bf16.mxu0 0
    %3000 = vmatpush1.bf16.msra.mxu0 %v2875
    %3001 = vmatprep.subr.bf16.mxu0 0
    %3002 = vmatpush1.bf16.msra.mxu0 %v2876
    %3003 = vmatprep.subr.bf16.mxu0 0
    %3004 = vmatpush1.bf16.msra.mxu0 %v2877
    %3005 = vmatprep.subr.bf16.mxu0 0
    %3006 = vmatpush1.bf16.msra.mxu0 %v2878
    %3007 = vmatprep.subr.bf16.mxu0 0
    %3008 = vmatpush1.bf16.msra.mxu0 %v2879
    %3009 = vmatprep.subr.bf16.mxu0 0
    %3010 = vmatpush1.bf16.msra.mxu0 %v2880
    %3011 = vmatprep.subr.bf16.mxu0 0
    %3012 = vmatpush1.bf16.msra.mxu0 %v2881
    %3013 = vmatprep.subr.bf16.mxu0 0
    %3014 = vmatpush1.bf16.msra.mxu0 %v2882
    %3015 = vmatprep.subr.bf16.mxu0 0
    %3016 = vmatpush1.bf16.msra.mxu0 %v2883
    %3017 = vmatprep.subr.bf16.mxu0 0
    %3018 = vmatpush1.bf16.msra.mxu0 %v2884
    %3019 = vmatprep.subr.bf16.mxu0 0
    %3020 = vmatpush1.bf16.msra.mxu0 %v2885
    %3021 = vmatprep.subr.bf16.mxu0 0
    %3022 = vmatpush1.bf16.msra.mxu0 %v2886
    %3023 = vmatprep.subr.bf16.mxu0 0
    %3024 = vmatpush1.bf16.msra.mxu0 %v2887
    %3025 = vmatprep.mubr.bf16.mxu0 %v156
    %3026 = vmatmul.mubr.bf16.gmra.mrb[0].mxu0 %v155
    %v3027 = vpop.f32.mrb[0].mxu0
    %v3028 = vadd.f32 %v2987, %v3027
    %v3029 = vpop.f32.mrb[0].mxu0
    %v3030 = vpop.f32.mrb[0].mxu0
    %v3031 = vadd.f32 %v2990, %v3030
    %v3032 = vpop.f32.mrb[0].mxu0
    %3033 = vdwg.mxu0
    %3034 = vmatprep.subr.bf16.mxu0 0
    %3035 = vmatpush1.bf16.msra.mxu0 %v2888
    %3036 = vmatprep.subr.bf16.mxu0 0
    %3037 = vmatpush1.bf16.msra.mxu0 %v2889
    %3038 = vmatprep.subr.bf16.mxu0 0
    %3039 = vmatpush1.bf16.msra.mxu0 %v2890
    %3040 = vmatprep.subr.bf16.mxu0 0
    %3041 = vmatpush1.bf16.msra.mxu0 %v2891
    %3042 = vmatprep.subr.bf16.mxu0 0
    %3043 = vmatpush1.bf16.msra.mxu0 %v2892
    %3044 = vmatprep.subr.bf16.mxu0 0
    %3045 = vmatpush1.bf16.msra.mxu0 %v2893
    %3046 = vmatprep.subr.bf16.mxu0 0
    %3047 = vmatpush1.bf16.msra.mxu0 %v2894
    %3048 = vmatprep.subr.bf16.mxu0 0
    %3049 = vmatpush1.bf16.msra.mxu0 %v2895
    %3050 = vmatprep.subr.bf16.mxu0 0
    %3051 = vmatpush1.bf16.msra.mxu0 %v2896
    %3052 = vmatprep.subr.bf16.mxu0 0
    %3053 = vmatpush1.bf16.msra.mxu0 %v2897
    %3054 = vmatprep.subr.bf16.mxu0 0
    %3055 = vmatpush1.bf16.msra.mxu0 %v2898
    %3056 = vmatprep.subr.bf16.mxu0 0
    %3057 = vmatpush1.bf16.msra.mxu0 %v2899
    %3058 = vmatprep.subr.bf16.mxu0 0
    %3059 = vmatpush1.bf16.msra.mxu0 %v2900
    %3060 = vmatprep.subr.bf16.mxu0 0
    %3061 = vmatpush1.bf16.msra.mxu0 %v2901
    %3062 = vmatprep.subr.bf16.mxu0 0
    %3063 = vmatpush1.bf16.msra.mxu0 %v2902
    %3064 = vmatprep.subr.bf16.mxu0 0
    %3065 = vmatpush1.bf16.msra.mxu0 %v2903
    %3066 = vmatprep.mubr.bf16.mxu0 %v158
    %3067 = vmatmul.mubr.bf16.gmra.mrb[0].mxu0 %v157
    %v3068 = vpop.f32.mrb[0].mxu0
    %v3069 = vadd.f32 %v3028, %v3068
    %v3070 = vpop.f32.mrb[0].mxu0
    %v3071 = vpop.f32.mrb[0].mxu0
    %v3072 = vadd.f32 %v3031, %v3071
    %v3073 = vpop.f32.mrb[0].mxu0
    %3074 = vdwg.mxu0
    %v3171 = vunpack.c.l.b16 %v2472
    %v3172 = vunpack.c.l.b16 %v2473
    %v3173 = vunpack.c.l.b16 %v2474
    %v3174 = vunpack.c.l.b16 %v2475
    %v3175 = vunpack.c.l.b16 %v2476
    %v3176 = vunpack.c.l.b16 %v2477
    %v3177 = vunpack.c.l.b16 %v2478
    %v3178 = vunpack.c.l.b16 %v2479
    %v3179 = vunpack.c.l.b16 %v2480
    %v3180 = vunpack.c.l.b16 %v2481
    %v3181 = vunpack.c.l.b16 %v2482
    %v3182 = vunpack.c.l.b16 %v2483
    %v3183 = vunpack.c.l.b16 %v2484
    %v3184 = vunpack.c.l.b16 %v2485
    %v3185 = vunpack.c.l.b16 %v2486
    %v3186 = vunpack.c.l.b16 %v2487
    %v3187 = vunpack.c.l.b16 %v2488
    %v3188 = vunpack.c.l.b16 %v2489
    %v3189 = vunpack.c.l.b16 %v2490
    %v3190 = vunpack.c.l.b16 %v2491
    %v3191 = vunpack.c.l.b16 %v2492
    %v3192 = vunpack.c.l.b16 %v2493
    %v3193 = vunpack.c.l.b16 %v2494
    %v3194 = vunpack.c.l.b16 %v2495
    %v3195 = vunpack.c.l.b16 %v2496
    %v3196 = vunpack.c.l.b16 %v2497
    %v3197 = vunpack.c.l.b16 %v2498
    %v3198 = vunpack.c.l.b16 %v2499
    %v3199 = vunpack.c.l.b16 %v2500
    %v3200 = vunpack.c.l.b16 %v2501
    %v3201 = vunpack.c.l.b16 %v2502
    %v3202 = vunpack.c.l.b16 %v2503
    %v3203 = vunpack.c.l.b16 %v2504
    %v3204 = vunpack.c.l.b16 %v2505
    %v3205 = vunpack.c.l.b16 %v2506
    %v3206 = vunpack.c.l.b16 %v2507
    %v3207 = vunpack.c.l.b16 %v2508
    %v3208 = vunpack.c.l.b16 %v2509
    %v3209 = vunpack.c.l.b16 %v2510
    %v3210 = vunpack.c.l.b16 %v2511
    %v3211 = vunpack.c.l.b16 %v2512
    %v3212 = vunpack.c.l.b16 %v2513
    %v3213 = vunpack.c.l.b16 %v2514
    %v3214 = vunpack.c.l.b16 %v2515
    %v3215 = vunpack.c.l.b16 %v2516
    %v3216 = vunpack.c.l.b16 %v2517
    %v3217 = vunpack.c.l.b16 %v2518
    %v3218 = vunpack.c.l.b16 %v2519
    %v3219 = vunpack.c.l.b16 %v2520
    %v3220 = vunpack.c.l.b16 %v2521
    %v3221 = vunpack.c.l.b16 %v2522
    %v3222 = vunpack.c.l.b16 %v2523
    %v3223 = vunpack.c.l.b16 %v2524
    %v3224 = vunpack.c.l.b16 %v2525
    %v3225 = vunpack.c.l.b16 %v2526
    %v3226 = vunpack.c.l.b16 %v2527
    %v3227 = vunpack.c.l.b16 %v2528
    %v3228 = vunpack.c.l.b16 %v2529
    %v3229 = vunpack.c.l.b16 %v2530
    %v3230 = vunpack.c.l.b16 %v2531
    %v3231 = vunpack.c.l.b16 %v2532
    %v3232 = vunpack.c.l.b16 %v2533
    %v3233 = vunpack.c.l.b16 %v2534
    %v3234 = vunpack.c.l.b16 %v2535
    %v3235 = vunpack.c.l.b16 %v2536
    %v3236 = vunpack.c.l.b16 %v2537
    %v3237 = vunpack.c.l.b16 %v2538
    %v3238 = vunpack.c.l.b16 %v2539
    %v3239 = vunpack.c.l.b16 %v2540
    %v3240 = vunpack.c.l.b16 %v2541
    %v3241 = vunpack.c.l.b16 %v2542
    %v3242 = vunpack.c.l.b16 %v2543
    %v3243 = vunpack.c.l.b16 %v2544
    %v3244 = vunpack.c.l.b16 %v2545
    %v3245 = vunpack.c.l.b16 %v2546
    %v3246 = vunpack.c.l.b16 %v2547
    %v3247 = vunpack.c.l.b16 %v2548
    %v3248 = vunpack.c.l.b16 %v2549
    %v3249 = vunpack.c.l.b16 %v2550
    %v3250 = vunpack.c.l.b16 %v2551
    %v3251 = vunpack.c.l.b16 %v2552
    %v3252 = vunpack.c.l.b16 %v2553
    %v3253 = vunpack.c.l.b16 %v2554
    %v3254 = vunpack.c.l.b16 %v2555
    %v3255 = vunpack.c.l.b16 %v2556
    %v3256 = vunpack.c.l.b16 %v2557
    %v3257 = vunpack.c.l.b16 %v2558
    %v3258 = vunpack.c.l.b16 %v2559
    %v3259 = vunpack.c.l.b16 %v2560
    %v3260 = vunpack.c.l.b16 %v2561
    %v3261 = vunpack.c.l.b16 %v2562
    %v3262 = vunpack.c.l.b16 %v2563
    %v3263 = vunpack.c.l.b16 %v2564
    %v3264 = vunpack.c.l.b16 %v2565
    %v3265 = vunpack.c.l.b16 %v2566
    %v3266 = vunpack.c.l.b16 %v2567
    %v3267 = vpack.c.b16 %v3172, %v3171
    %v3268 = vpack.c.b16 %v3174, %v3173
    %v3269 = vpack.c.b16 %v3176, %v3175
    %v3270 = vpack.c.b16 %v3178, %v3177
    %v3271 = vpack.c.b16 %v3180, %v3179
    %v3272 = vpack.c.b16 %v3182, %v3181
    %v3273 = vpack.c.b16 %v3184, %v3183
    %v3274 = vpack.c.b16 %v3186, %v3185
    %v3275 = vpack.c.b16 %v3188, %v3187
    %v3276 = vpack.c.b16 %v3190, %v3189
    %v3277 = vpack.c.b16 %v3192, %v3191
    %v3278 = vpack.c.b16 %v3194, %v3193
    %v3279 = vpack.c.b16 %v3196, %v3195
    %v3280 = vpack.c.b16 %v3198, %v3197
    %v3281 = vpack.c.b16 %v3200, %v3199
    %v3282 = vpack.c.b16 %v3202, %v3201
    %v3283 = vpack.c.b16 %v3204, %v3203
    %v3284 = vpack.c.b16 %v3206, %v3205
    %v3285 = vpack.c.b16 %v3208, %v3207
    %v3286 = vpack.c.b16 %v3210, %v3209
    %v3287 = vpack.c.b16 %v3212, %v3211
    %v3288 = vpack.c.b16 %v3214, %v3213
    %v3289 = vpack.c.b16 %v3216, %v3215
    %v3290 = vpack.c.b16 %v3218, %v3217
    %v3291 = vpack.c.b16 %v3220, %v3219
    %v3292 = vpack.c.b16 %v3222, %v3221
    %v3293 = vpack.c.b16 %v3224, %v3223
    %v3294 = vpack.c.b16 %v3226, %v3225
    %v3295 = vpack.c.b16 %v3228, %v3227
    %v3296 = vpack.c.b16 %v3230, %v3229
    %v3297 = vpack.c.b16 %v3232, %v3231
    %v3298 = vpack.c.b16 %v3234, %v3233
    %v3299 = vpack.c.b16 %v3236, %v3235
    %v3300 = vpack.c.b16 %v3238, %v3237
    %v3301 = vpack.c.b16 %v3240, %v3239
    %v3302 = vpack.c.b16 %v3242, %v3241
    %v3303 = vpack.c.b16 %v3244, %v3243
    %v3304 = vpack.c.b16 %v3246, %v3245
    %v3305 = vpack.c.b16 %v3248, %v3247
    %v3306 = vpack.c.b16 %v3250, %v3249
    %v3307 = vpack.c.b16 %v3252, %v3251
    %v3308 = vpack.c.b16 %v3254, %v3253
    %v3309 = vpack.c.b16 %v3256, %v3255
    %v3310 = vpack.c.b16 %v3258, %v3257
    %v3311 = vpack.c.b16 %v3260, %v3259
    %v3312 = vpack.c.b16 %v3262, %v3261
    %v3313 = vpack.c.b16 %v3264, %v3263
    %v3314 = vpack.c.b16 %v3266, %v3265
    %3363 = vmatprep.subr.bf16.mxu0 0
    %3364 = vmatpush1.bf16.msra.mxu0 %v3267
    %3365 = vmatprep.subr.bf16.mxu0 0
    %3366 = vmatpush1.bf16.msra.mxu0 %v3268
    %3367 = vmatprep.subr.bf16.mxu0 0
    %3368 = vmatpush1.bf16.msra.mxu0 %v3269
    %3369 = vmatprep.subr.bf16.mxu0 0
    %3370 = vmatpush1.bf16.msra.mxu0 %v3270
    %3371 = vmatprep.subr.bf16.mxu0 0
    %3372 = vmatpush1.bf16.msra.mxu0 %v3271
    %3373 = vmatprep.subr.bf16.mxu0 0
    %3374 = vmatpush1.bf16.msra.mxu0 %v3272
    %3375 = vmatprep.subr.bf16.mxu0 0
    %3376 = vmatpush1.bf16.msra.mxu0 %v3273
    %3377 = vmatprep.subr.bf16.mxu0 0
    %3378 = vmatpush1.bf16.msra.mxu0 %v3274
    %3379 = vmatprep.subr.bf16.mxu0 0
    %3380 = vmatpush1.bf16.msra.mxu0 %v3275
    %3381 = vmatprep.subr.bf16.mxu0 0
    %3382 = vmatpush1.bf16.msra.mxu0 %v3276
    %3383 = vmatprep.subr.bf16.mxu0 0
    %3384 = vmatpush1.bf16.msra.mxu0 %v3277
    %3385 = vmatprep.subr.bf16.mxu0 0
    %3386 = vmatpush1.bf16.msra.mxu0 %v3278
    %3387 = vmatprep.subr.bf16.mxu0 0
    %3388 = vmatpush1.bf16.msra.mxu0 %v3279
    %3389 = vmatprep.subr.bf16.mxu0 0
    %3390 = vmatpush1.bf16.msra.mxu0 %v3280
    %3391 = vmatprep.subr.bf16.mxu0 0
    %3392 = vmatpush1.bf16.msra.mxu0 %v3281
    %3393 = vmatprep.subr.bf16.mxu0 0
    %3394 = vmatpush1.bf16.msra.mxu0 %v3282
    %3395 = vmatprep.mubr.bf16.mxu0 %v148
    %3396 = vmatmul.mubr.bf16.gmra.mrb[0].mxu0 %v147
    %v3397 = vpop.f32.mrb[0].mxu0
    %v3398 = vadd.f32 %v3069, %v3397
    %v3399 = vpop.f32.mrb[0].mxu0
    %v3400 = vpop.f32.mrb[0].mxu0
    %v3401 = vadd.f32 %v3072, %v3400
    %v3402 = vpop.f32.mrb[0].mxu0
    %3403 = vdwg.mxu0
    %3404 = vmatprep.subr.bf16.mxu0 0
    %3405 = vmatpush1.bf16.msra.mxu0 %v3283
    %3406 = vmatprep.subr.bf16.mxu0 0
    %3407 = vmatpush1.bf16.msra.mxu0 %v3284
    %3408 = vmatprep.subr.bf16.mxu0 0
    %3409 = vmatpush1.bf16.msra.mxu0 %v3285
    %3410 = vmatprep.subr.bf16.mxu0 0
    %3411 = vmatpush1.bf16.msra.mxu0 %v3286
    %3412 = vmatprep.subr.bf16.mxu0 0
    %3413 = vmatpush1.bf16.msra.mxu0 %v3287
    %3414 = vmatprep.subr.bf16.mxu0 0
    %3415 = vmatpush1.bf16.msra.mxu0 %v3288
    %3416 = vmatprep.subr.bf16.mxu0 0
    %3417 = vmatpush1.bf16.msra.mxu0 %v3289
    %3418 = vmatprep.subr.bf16.mxu0 0
    %3419 = vmatpush1.bf16.msra.mxu0 %v3290
    %3420 = vmatprep.subr.bf16.mxu0 0
    %3421 = vmatpush1.bf16.msra.mxu0 %v3291
    %3422 = vmatprep.subr.bf16.mxu0 0
    %3423 = vmatpush1.bf16.msra.mxu0 %v3292
    %3424 = vmatprep.subr.bf16.mxu0 0
    %3425 = vmatpush1.bf16.msra.mxu0 %v3293
    %3426 = vmatprep.subr.bf16.mxu0 0
    %3427 = vmatpush1.bf16.msra.mxu0 %v3294
    %3428 = vmatprep.subr.bf16.mxu0 0
    %3429 = vmatpush1.bf16.msra.mxu0 %v3295
    %3430 = vmatprep.subr.bf16.mxu0 0
    %3431 = vmatpush1.bf16.msra.mxu0 %v3296
    %3432 = vmatprep.subr.bf16.mxu0 0
    %3433 = vmatpush1.bf16.msra.mxu0 %v3297
    %3434 = vmatprep.subr.bf16.mxu0 0
    %3435 = vmatpush1.bf16.msra.mxu0 %v3298
    %3436 = vmatprep.mubr.bf16.mxu0 %v150
    %3437 = vmatmul.mubr.bf16.gmra.mrb[0].mxu0 %v149
    %v3438 = vpop.f32.mrb[0].mxu0
    %v3439 = vadd.f32 %v3398, %v3438
    %v3440 = vpop.f32.mrb[0].mxu0
    %v3441 = vpop.f32.mrb[0].mxu0
    %v3442 = vadd.f32 %v3401, %v3441
    %v3443 = vpop.f32.mrb[0].mxu0
    %3444 = vdwg.mxu0
    %3445 = vmatprep.subr.bf16.mxu0 0
    %3446 = vmatpush1.bf16.msra.mxu0 %v3299
    %3447 = vmatprep.subr.bf16.mxu0 0
    %3448 = vmatpush1.bf16.msra.mxu0 %v3300
    %3449 = vmatprep.subr.bf16.mxu0 0
    %3450 = vmatpush1.bf16.msra.mxu0 %v3301
    %3451 = vmatprep.subr.bf16.mxu0 0
    %3452 = vmatpush1.bf16.msra.mxu0 %v3302
    %3453 = vmatprep.subr.bf16.mxu0 0
    %3454 = vmatpush1.bf16.msra.mxu0 %v3303
    %3455 = vmatprep.subr.bf16.mxu0 0
    %3456 = vmatpush1.bf16.msra.mxu0 %v3304
    %3457 = vmatprep.subr.bf16.mxu0 0
    %3458 = vmatpush1.bf16.msra.mxu0 %v3305
    %3459 = vmatprep.subr.bf16.mxu0 0
    %3460 = vmatpush1.bf16.msra.mxu0 %v3306
    %3461 = vmatprep.subr.bf16.mxu0 0
    %3462 = vmatpush1.bf16.msra.mxu0 %v3307
    %3463 = vmatprep.subr.bf16.mxu0 0
    %3464 = vmatpush1.bf16.msra.mxu0 %v3308
    %3465 = vmatprep.subr.bf16.mxu0 0
    %3466 = vmatpush1.bf16.msra.mxu0 %v3309
    %3467 = vmatprep.subr.bf16.mxu0 0
    %3468 = vmatpush1.bf16.msra.mxu0 %v3310
    %3469 = vmatprep.subr.bf16.mxu0 0
    %3470 = vmatpush1.bf16.msra.mxu0 %v3311
    %3471 = vmatprep.subr.bf16.mxu0 0
    %3472 = vmatpush1.bf16.msra.mxu0 %v3312
    %3473 = vmatprep.subr.bf16.mxu0 0
    %3474 = vmatpush1.bf16.msra.mxu0 %v3313
    %3475 = vmatprep.subr.bf16.mxu0 0
    %3476 = vmatpush1.bf16.msra.mxu0 %v3314
    %3477 = vmatprep.mubr.bf16.mxu0 %v152
    %3478 = vmatmul.mubr.bf16.gmra.mrb[0].mxu0 %v151
    %v3479 = vpop.f32.mrb[0].mxu0
    %v3480 = vadd.f32 %v3439, %v3479
    %v3481 = vpop.f32.mrb[0].mxu0
    %v3482 = vpop.f32.mrb[0].mxu0
    %v3483 = vadd.f32 %v3442, %v3482
    %v3484 = vpop.f32.mrb[0].mxu0
    %3485 = vdwg.mxu0
    %v3486 = vlaneseq
    %v3487 = vand.u32 %v3486, 127
    %vm3488 = vcmp.lt.s32.totalorder %v3487, 10
    %v3489 = vmul.f32 %v3480, %v3480
    %v3490 = vmul.f32 %v3483, %v3483
    %v3491 = vmul.f32 %v2433, %v3489
    %v3492 = vmul.f32 %v2433, %v3490
    %v3493 = vsel %vm3488, %v3491, 0.0
    %v3494 = vsel %vm3488, %v3492, 0.0
    %vm3495 = vcmp.eq.s32.totalorder %v3487, 10
    %v3496 = vstv %s160
    %v3497 = vmul.f32 %v3496, %v3480
    %v3498 = vmul.f32 %v3496, %v3483
    %v3499 = vsel %vm3495, %v3497, 0.0
    %v3500 = vsel %vm3495, %v3498, 0.0
    %v3501 = vadd.f32 %v3493, %v3499
    %v3502 = vadd.f32 %v3494, %v3500
    %3503 = vadd.xlane.f32.xlu0 %v3501
    %v3504 = vpop.xlane.xlu0 %3503
    %3505 = vadd.xlane.f32.xlu0 %v3502
    %v3506 = vpop.xlane.xlu0 %3505
    %v3507 = vadd.f32 %v2464, %v3504
    %v3508 = vadd.f32 %v2471, %v3506
    %v3509 = vstv %s162
    %v3510 = vadd.f32 %v3507, %v3509
    %v3511 = vadd.f32 %v3508, %v3509
    %v3512 = vmax.f32 %v3510, 0.0
    %v3513 = vmax.f32 %v3511, 0.0
    %v3516 = vlaneseq
    %v3517 = vshrl.u32 %v3516, 7
    %v3518 = vsub.s32 %v3487, %v3517
    %v3519 = vrot.slane %v3512, %v3518
    %v3520 = vadd.s32 %v3487, 4294967288
    %v3521 = vlaneseq
    %v3522 = vshrl.u32 %v3521, 7
    %v3523 = vsub.s32 %v3520, %v3522
    %v3524 = vrot.slane %v3513, %v3523
    %vm3525 = vcmask 130112
    %v3526 = vsel %vm3525, %v3524, %v3519
    %vm3528 = vcmask 122880
    %3529 = vst.msk [vmem:[#allocation16] sm:$0x1] %vm3528, %v3526
    // Predicated region
    $region62: #{tpu_custom_call.1} parent=1 // pred_check
      _
    $region63: #{tpu_custom_call.1} parent=1 // pred_check_branch
      %3531 = sbr.rel (0) target = $region65
    $region64: #{tpu_custom_call.1} parent=1 // pred_region
      %s3533 = ssub.s32 16, 16
      %3534 = vsyncadd [#allocation5], %s3533
      %s3536 = sshll.u32 [#allocation16], 4
      %s3537 = int_to_ptr.vmem [resolvable:$true] %s3536
      %3539 = dma.vmem_to_hbm [thread:$0]  %s3537, 16, %s8, [#allocation5]
    $region65: #{tpu_custom_call.1} parent=1 // pred_fallthru
      _
    // Predicated region
    $region66: #{tpu_custom_call.1} parent=1 // pred_check
      _
    $region67: #{tpu_custom_call.1} parent=1 // pred_check_branch
      %3541 = sbr.rel (0) target = $region69
    $region68: #{tpu_custom_call.1} parent=1 // pred_region
      %3542 = dma.done [#allocation5], 16
    $region69: #{tpu_custom_call.1} parent=1 // pred_fallthru
      _
    %3543 = vsyncpa [#allocation4], 1
    %3544 = vsyncpa [#allocation8], 1
    %3545 = vsyncpa [#allocation11], 1
    %3546 = vsyncpa [#allocation14], 1
    %3547 = vsyncpa [#allocation5], 1
    %3548 = vsyncpa [#allocation6], 1

</llo_original>
